<compile_context>
chip_gen: v5e
topology: v5e:2x2
jax: 0.10.0
libtpu: 0.0.40
codegen_flags: <defaults>
</compile_context>

<pallas_src>
import jax
import jax.numpy as jnp
from jax.experimental import pallas as pl
from jax.experimental.pallas import tpu as pltpu


def _shift_down(v, d):
    """row t <- v[t - d]; first d rows zero (conv 'left' tap)."""
    T = v.shape[0]
    zeros = jnp.zeros((d, v.shape[1]), v.dtype)
    return jnp.concatenate([zeros, v[:T - d, :]], axis=0)


def _shift_up(v, d):
    """row t <- v[t + d]; last d rows zero (conv 'right' tap)."""
    T = v.shape[0]
    zeros = jnp.zeros((d, v.shape[1]), v.dtype)
    return jnp.concatenate([v[d:, :], zeros], axis=0)


def _aggregate_kernel(x_ref,
                      wmid_ref,
                      w1s_ref, b1_ref, s1_ref, t1_ref,
                      w2s_ref, b2_ref, s2_ref, t2_ref,
                      w3s_ref, b3_ref, s3_ref, t3_ref,
                      gw_ref, gb_ref, thw_ref, thb_ref, phw_ref, phb_ref,
                      w0w_ref, w0b_ref, wbns_ref, wbnt_ref,
                      w5_ref, s5_ref, t5_ref,
                      out_ref):
    f32 = jnp.float32
    bf16 = jnp.bfloat16
    T = out_ref.shape[1]
    C = out_ref.shape[2]
    M = b1_ref.shape[1]

    x = x_ref[0, :, :]                        # (T, C) f32 — residual (kept f32)
    x_bf = x.astype(bf16)

    # Fused "center tap" matmul: conv_1/2/3 k=1 terms + conv_4 (1x1, no bias)
    # all consume the unshifted input -> one (T, C) @ (C, 4M) MXU call.
    base = jnp.dot(x_bf, wmid_ref[...], preferred_element_type=f32)   # (T, 4M)

    def dil_branch(ws_ref, b_ref, s_ref, t_ref, d, gidx):
        """Conv1d(k=3, dilation=d, padding=d) -> ReLU -> folded BatchNorm."""
        acc = base[:, gidx * M:(gidx + 1) * M] + b_ref[...]
        acc = acc + jnp.dot(_shift_down(x, d).astype(bf16), ws_ref[0],
                            preferred_element_type=f32)
        acc = acc + jnp.dot(_shift_up(x, d).astype(bf16), ws_ref[1],
                            preferred_element_type=f32)
        return jnp.maximum(acc, 0.0) * s_ref[...] + t_ref[...]        # f32 epilogue

    out1 = dil_branch(w1s_ref, b1_ref, s1_ref, t1_ref, 1, 0)
    out2 = dil_branch(w2s_ref, b2_ref, s2_ref, t2_ref, 2, 1)
    out3 = dil_branch(w3s_ref, b3_ref, s3_ref, t3_ref, 4, 2)
    out4 = jnp.maximum(base[:, 3 * M:4 * M], 0.0)                     # (T, M)
    out4_bf = out4.astype(bf16)

    # NONLocalBlock1D(M, sub_sample=False, bn_layer=True), inter = M // 2.
    # Reassociated (no softmax): y = (theta @ (phi^T @ g)) / T.
    g_x = jnp.dot(out4_bf, gw_ref[...], preferred_element_type=f32) + gb_ref[...]
    th_x = jnp.dot(out4_bf, thw_ref[...], preferred_element_type=f32) + thb_ref[...]
    ph_x = jnp.dot(out4_bf, phw_ref[...], preferred_element_type=f32) + phb_ref[...]
    s_mat = jnp.dot(ph_x.T.astype(bf16), g_x.astype(bf16),
                    preferred_element_type=f32)                        # (I, I)
    y = jnp.dot(th_x.astype(bf16), s_mat.astype(bf16),
                preferred_element_type=f32) * (1.0 / T)                # (T, I)
    # W = Conv1d(I->M, k=1) followed by BatchNorm (folded scale/shift).
    w_y = (jnp.dot(y.astype(bf16), w0w_ref[...], preferred_element_type=f32)
           + w0b_ref[...]) * wbns_ref[...] + wbnt_ref[...]
    nl = w_y + out4                                                    # (T, M)

    # conv_5 (k=3, pad=1, no bias) over cat(out1, out2, out3, nl), decomposed
    # per channel group with in-register shifted slices:
    #   acc5 = sum_g [ shift_down(out_g) @ w5[0,g] + out_g @ w5[1,g]
    #                  + shift_up(out_g) @ w5[2,g] ]
    acc5 = jnp.zeros((T, C), f32)
    for gidx, og in enumerate((out1, out2, out3, nl)):
        acc5 = acc5 + jnp.dot(_shift_down(og, 1).astype(bf16), w5_ref[0, gidx],
                              preferred_element_type=f32)
        acc5 = acc5 + jnp.dot(og.astype(bf16), w5_ref[1, gidx],
                              preferred_element_type=f32)
        acc5 = acc5 + jnp.dot(_shift_up(og, 1).astype(bf16), w5_ref[2, gidx],
                              preferred_element_type=f32)

    out5 = jnp.maximum(acc5, 0.0) * s5_ref[...] + t5_ref[...]
    out_ref[0, :, :] = out5 + x


def aggregate_forward(x, params):
    """x: (B, T, C) float32 -> (B, T, C) float32."""
    B, T, C = x.shape
    M = params['w4'].shape[1]
    bf16 = jnp.bfloat16

    # One-time wrapper-side weight repacking: bf16 casts, center-tap fusion,
    # side taps (k=0,2) stacked, w5 reshaped per concat group.
    wmid = jnp.concatenate([params['w1'][1], params['w2'][1],
                            params['w3'][1], params['w4']], axis=1).astype(bf16)

    def side_taps(w):                     # (3, C, M) -> (2, C, M): taps k=0, k=2
        return jnp.stack([w[0], w[2]], axis=0).astype(bf16)

    w5g = params['w5'].reshape(3, 4, M, C).astype(bf16)

    weight_args = [
        wmid,
        side_taps(params['w1']), params['b1'], params['s1'], params['t1'],
        side_taps(params['w2']), params['b2'], params['s2'], params['t2'],
        side_taps(params['w3']), params['b3'], params['s3'], params['t3'],
        params['gw'].astype(bf16), params['gb'],
        params['thw'].astype(bf16), params['thb'],
        params['phw'].astype(bf16), params['phb'],
        params['w0w'].astype(bf16), params['w0b'],
        params['wbns'], params['wbnt'],
        w5g, params['s5'], params['t5'],
    ]

    def full_spec(arr):
        nd = arr.ndim
        return pl.BlockSpec(arr.shape, lambda b, _n=nd: (0,) * _n)

    in_specs = [pl.BlockSpec((1, T, C), lambda b: (b, 0, 0))]
    in_specs += [full_spec(a) for a in weight_args]

    return pl.pallas_call(
        _aggregate_kernel,
        out_shape=jax.ShapeDtypeStruct((B, T, C), jnp.float32),
        grid=(B,),
        in_specs=in_specs,
        out_specs=pl.BlockSpec((1, T, C), lambda b: (b, 0, 0)),
        compiler_params=pltpu.CompilerParams(
            dimension_semantics=("parallel",),
            vmem_limit_bytes=32 * 1024 * 1024),
    )(x, *weight_args)


def init_params(key, C):
    """Deterministic synthetic parameters. M is the analog of 512, I of 256."""
    M = C // 4
    ks = jax.random.split(key, 24)

    def nrm(k, shape, scale=0.05):
        return (scale * jax.random.normal(k, shape)).astype(jnp.float32)

    def bn_fold(k, n):
        k1, k2, k3, k4 = jax.random.split(k, 4)
        gamma = 1.0 + 0.1 * jax.random.normal(k1, (1, n))
        beta = 0.1 * jax.random.normal(k2, (1, n))
        mean = 0.1 * jax.random.normal(k3, (1, n))
        var = 1.0 + 0.1 * jnp.abs(jax.random.normal(k4, (1, n)))
        s = gamma * jax.lax.rsqrt(var + 1e-5)
        t = beta - mean * s
        return s.astype(jnp.float32), t.astype(jnp.float32)

    I = M // 2
    p = {}
    # conv_1 / conv_2 / conv_3: weight[k, c_in, c_out] == torch W[c_out, c_in, k]
    p['w1'] = nrm(ks[0], (3, C, M)); p['b1'] = nrm(ks[1], (1, M))
    p['s1'], p['t1'] = bn_fold(ks[2], M)
    p['w2'] = nrm(ks[3], (3, C, M)); p['b2'] = nrm(ks[4], (1, M))
    p['s2'], p['t2'] = bn_fold(ks[5], M)
    p['w3'] = nrm(ks[6], (3, C, M)); p['b3'] = nrm(ks[7], (1, M))
    p['s3'], p['t3'] = bn_fold(ks[8], M)
    # conv_4 (1x1, no bias)
    p['w4'] = nrm(ks[9], (C, M))
    # non-local g / theta / phi (1x1 convs with bias), W conv + BN.
    p['gw'] = nrm(ks[10], (M, I));  p['gb'] = nrm(ks[11], (1, I))
    p['thw'] = nrm(ks[12], (M, I)); p['thb'] = nrm(ks[13], (1, I))
    p['phw'] = nrm(ks[14], (M, I)); p['phb'] = nrm(ks[15], (1, I))
    p['w0w'] = nrm(ks[16], (I, M)); p['w0b'] = nrm(ks[17], (1, M))
    # PyTorch inits this BN's gamma/beta to 0, which would make the whole
    # non-local W branch a no-op; use non-zero synthetic values here so the
    # test actually exercises that path (forward semantics are unchanged).
    p['wbns'], p['wbnt'] = bn_fold(ks[20], M)
    # conv_5 (k=3, pad=1, no bias) + BN
    p['w5'] = nrm(ks[18], (3, C, C))
    p['s5'], p['t5'] = bn_fold(ks[19], C)
    return p


def aggregate_ref(x, p):
    """Pure-JAX f32 reference (mirrors the PyTorch forward, eval-mode BN)."""
    B, T, C = x.shape
    hi = jax.lax.Precision.HIGHEST

    def dconv(w, b, d):
        xp = jnp.pad(x, ((0, 0), (d, d), (0, 0)))
        acc = jnp.zeros((B, T, w.shape[2]), jnp.float32) + b
        for k in range(3):
            acc = acc + jnp.einsum('btc,cm->btm', xp[:, k * d:k * d + T, :],
                                   w[k], precision=hi)
        return acc

    out1 = jnp.maximum(dconv(p['w1'], p['b1'], 1), 0.0) * p['s1'] + p['t1']
    out2 = jnp.maximum(dconv(p['w2'], p['b2'], 2), 0.0) * p['s2'] + p['t2']
    out3 = jnp.maximum(dconv(p['w3'], p['b3'], 4), 0.0) * p['s3'] + p['t3']
    out4 = jnp.maximum(jnp.einsum('btc,cm->btm', x, p['w4'], precision=hi), 0.0)

    g = jnp.einsum('btm,mi->bti', out4, p['gw'], precision=hi) + p['gb']
    th = jnp.einsum('btm,mi->bti', out4, p['thw'], precision=hi) + p['thb']
    ph = jnp.einsum('btm,mi->bti', out4, p['phw'], precision=hi) + p['phb']
    f = jnp.einsum('bti,bsi->bts', th, ph, precision=hi) / T
    y = jnp.einsum('bts,bsi->bti', f, g, precision=hi)
    wy = (jnp.einsum('bti,im->btm', y, p['w0w'], precision=hi)
          + p['w0b']) * p['wbns'] + p['wbnt']
    nl = wy + out4

    cat = jnp.concatenate([out1, out2, out3, nl], axis=-1)
    catp = jnp.pad(cat, ((0, 0), (1, 1), (0, 0)))
    acc5 = jnp.zeros((B, T, C), jnp.float32)
    for k in range(3):
        acc5 = acc5 + jnp.einsum('btc,cd->btd', catp[:, k:k + T, :],
                                 p['w5'][k], precision=hi)
    out5 = jnp.maximum(acc5, 0.0) * p['s5'] + p['t5']
    return out5 + x


if __name__ == "__main__":
    # Small shapes: C plays the role of len_feature (=2048 in the real config).
    B, T, C = 2, 16, 64
    key = jax.random.PRNGKey(0)
    kx, kp = jax.random.split(key)
    x = jax.random.normal(kx, (B, T, C), dtype=jnp.float32)
    params = init_params(kp, C)

    out = aggregate_forward(x, params)
    out = jax.block_until_ready(out)
    assert out.shape == (B, T, C)

    ref = aggregate_ref(x, params)
    err = float(jnp.max(jnp.abs(out - ref)))
    # bf16 matmul operands (f32 accumulation) vs. f32 reference: tolerance
    # loosened accordingly (values are O(1-3), so this is ~2% relative).
    assert err < 8e-2, f"max abs error too large: {err}"
    print("KERNEL_OK")
</pallas_src>

<mosaic_0001>
module attributes {stable_mosaic.version = 11 : i64} {
  func.func @_aggregate_kernel(%arg0: i32, %arg1: memref<1x16x64xf32, #tpu.memory_space<vmem>>, %arg2: memref<64x64xbf16, #tpu.memory_space<vmem>>, %arg3: memref<2x64x16xbf16, #tpu.memory_space<vmem>>, %arg4: memref<1x16xf32, #tpu.memory_space<vmem>>, %arg5: memref<1x16xf32, #tpu.memory_space<vmem>>, %arg6: memref<1x16xf32, #tpu.memory_space<vmem>>, %arg7: memref<2x64x16xbf16, #tpu.memory_space<vmem>>, %arg8: memref<1x16xf32, #tpu.memory_space<vmem>>, %arg9: memref<1x16xf32, #tpu.memory_space<vmem>>, %arg10: memref<1x16xf32, #tpu.memory_space<vmem>>, %arg11: memref<2x64x16xbf16, #tpu.memory_space<vmem>>, %arg12: memref<1x16xf32, #tpu.memory_space<vmem>>, %arg13: memref<1x16xf32, #tpu.memory_space<vmem>>, %arg14: memref<1x16xf32, #tpu.memory_space<vmem>>, %arg15: memref<16x8xbf16, #tpu.memory_space<vmem>>, %arg16: memref<1x8xf32, #tpu.memory_space<vmem>>, %arg17: memref<16x8xbf16, #tpu.memory_space<vmem>>, %arg18: memref<1x8xf32, #tpu.memory_space<vmem>>, %arg19: memref<16x8xbf16, #tpu.memory_space<vmem>>, %arg20: memref<1x8xf32, #tpu.memory_space<vmem>>, %arg21: memref<8x16xbf16, #tpu.memory_space<vmem>>, %arg22: memref<1x16xf32, #tpu.memory_space<vmem>>, %arg23: memref<1x16xf32, #tpu.memory_space<vmem>>, %arg24: memref<1x16xf32, #tpu.memory_space<vmem>>, %arg25: memref<3x4x16x64xbf16, #tpu.memory_space<vmem>>, %arg26: memref<1x64xf32, #tpu.memory_space<vmem>>, %arg27: memref<1x64xf32, #tpu.memory_space<vmem>>, %arg28: memref<1x16x64xf32, #tpu.memory_space<vmem>>) attributes {dimension_semantics = [#tpu.dimension_semantics<parallel>], iteration_bounds = array<i64: 2>, scalar_prefetch = 0 : i64, scratch_operands = 0 : i64, tpu.core_type = #tpu.core_type<tc>, window_params = [{transform_indices = @transform_0, window_bounds = array<i64: 1, 16, 64>}, {pipeline_mode = #tpu.pipeline_mode<synchronous>, transform_indices = @transform_1, window_bounds = array<i64: 64, 64>}, {pipeline_mode = #tpu.pipeline_mode<synchronous>, transform_indices = @transform_2, window_bounds = array<i64: 2, 64, 16>}, {pipeline_mode = #tpu.pipeline_mode<synchronous>, transform_indices = @transform_3, window_bounds = array<i64: 1, 16>}, {pipeline_mode = #tpu.pipeline_mode<synchronous>, transform_indices = @transform_4, window_bounds = array<i64: 1, 16>}, {pipeline_mode = #tpu.pipeline_mode<synchronous>, transform_indices = @transform_5, window_bounds = array<i64: 1, 16>}, {pipeline_mode = #tpu.pipeline_mode<synchronous>, transform_indices = @transform_6, window_bounds = array<i64: 2, 64, 16>}, {pipeline_mode = #tpu.pipeline_mode<synchronous>, transform_indices = @transform_7, window_bounds = array<i64: 1, 16>}, {pipeline_mode = #tpu.pipeline_mode<synchronous>, transform_indices = @transform_8, window_bounds = array<i64: 1, 16>}, {pipeline_mode = #tpu.pipeline_mode<synchronous>, transform_indices = @transform_9, window_bounds = array<i64: 1, 16>}, {pipeline_mode = #tpu.pipeline_mode<synchronous>, transform_indices = @transform_10, window_bounds = array<i64: 2, 64, 16>}, {pipeline_mode = #tpu.pipeline_mode<synchronous>, transform_indices = @transform_11, window_bounds = array<i64: 1, 16>}, {pipeline_mode = #tpu.pipeline_mode<synchronous>, transform_indices = @transform_12, window_bounds = array<i64: 1, 16>}, {pipeline_mode = #tpu.pipeline_mode<synchronous>, transform_indices = @transform_13, window_bounds = array<i64: 1, 16>}, {pipeline_mode = #tpu.pipeline_mode<synchronous>, transform_indices = @transform_14, window_bounds = array<i64: 16, 8>}, {pipeline_mode = #tpu.pipeline_mode<synchronous>, transform_indices = @transform_15, window_bounds = array<i64: 1, 8>}, {pipeline_mode = #tpu.pipeline_mode<synchronous>, transform_indices = @transform_16, window_bounds = array<i64: 16, 8>}, {pipeline_mode = #tpu.pipeline_mode<synchronous>, transform_indices = @transform_17, window_bounds = array<i64: 1, 8>}, {pipeline_mode = #tpu.pipeline_mode<synchronous>, transform_indices = @transform_18, window_bounds = array<i64: 16, 8>}, {pipeline_mode = #tpu.pipeline_mode<synchronous>, transform_indices = @transform_19, window_bounds = array<i64: 1, 8>}, {pipeline_mode = #tpu.pipeline_mode<synchronous>, transform_indices = @transform_20, window_bounds = array<i64: 8, 16>}, {pipeline_mode = #tpu.pipeline_mode<synchronous>, transform_indices = @transform_21, window_bounds = array<i64: 1, 16>}, {pipeline_mode = #tpu.pipeline_mode<synchronous>, transform_indices = @transform_22, window_bounds = array<i64: 1, 16>}, {pipeline_mode = #tpu.pipeline_mode<synchronous>, transform_indices = @transform_23, window_bounds = array<i64: 1, 16>}, {pipeline_mode = #tpu.pipeline_mode<synchronous>, transform_indices = @transform_24, window_bounds = array<i64: 3, 4, 16, 64>}, {pipeline_mode = #tpu.pipeline_mode<synchronous>, transform_indices = @transform_25, window_bounds = array<i64: 1, 64>}, {pipeline_mode = #tpu.pipeline_mode<synchronous>, transform_indices = @transform_26, window_bounds = array<i64: 1, 64>}, {transform_indices = @transform_27, window_bounds = array<i64: 1, 16, 64>}]} {
    %c0 = arith.constant 0 : index
    %c0_0 = arith.constant 0 : index
    %c0_1 = arith.constant 0 : index
    %0 = vector.load %arg1[%c0, %c0_0, %c0_1] : memref<1x16x64xf32, #tpu.memory_space<vmem>>, vector<1x16x64xf32>
    %1 = vector.shape_cast %0 : vector<1x16x64xf32> to vector<16x64xf32>
    %2 = arith.truncf %1 : vector<16x64xf32> to vector<16x64xbf16>
    %c0_2 = arith.constant 0 : index
    %c0_3 = arith.constant 0 : index
    %3 = vector.load %arg2[%c0_2, %c0_3] : memref<64x64xbf16, #tpu.memory_space<vmem>>, vector<64x64xbf16>
    %cst = arith.constant dense<0.000000e+00> : vector<16x64xf32>
    %4 = tpu.matmul %2, %3, %cst {dimension_numbers = #tpu.dot_dimension_numbers<[1], [0], [0], [1], [0, 0, 1, 1], [], []>} : vector<16x64xbf16>, vector<64x64xbf16>, vector<16x64xf32> -> vector<16x64xf32>
    %5 = vector.extract_strided_slice %4 {offsets = [0, 0], sizes = [16, 16], strides = [1, 1]} : vector<16x64xf32> to vector<16x16xf32>
    %c0_4 = arith.constant 0 : index
    %c0_5 = arith.constant 0 : index
    %6 = vector.load %arg4[%c0_4, %c0_5] : memref<1x16xf32, #tpu.memory_space<vmem>>, vector<1x16xf32>
    %7 = vector.broadcast %6 : vector<1x16xf32> to vector<16x16xf32>
    %8 = arith.addf %5, %7 : vector<16x16xf32>
    %cst_6 = arith.constant 0.000000e+00 : f32
    %9 = vector.broadcast %cst_6 : f32 to vector<1x64xf32>
    %10 = vector.extract_strided_slice %1 {offsets = [0, 0], sizes = [15, 64], strides = [1, 1]} : vector<16x64xf32> to vector<15x64xf32>
    %11 = tpu.concatenate %9, %10 in 0 : vector<1x64xf32>, vector<15x64xf32> -> vector<16x64xf32>
    %12 = arith.truncf %11 : vector<16x64xf32> to vector<16x64xbf16>
    %c0_7 = arith.constant 0 : index
    %c0_8 = arith.constant 0 : index
    %c0_9 = arith.constant 0 : index
    %13 = vector.load %arg3[%c0_7, %c0_8, %c0_9] : memref<2x64x16xbf16, #tpu.memory_space<vmem>>, vector<1x64x16xbf16>
    %14 = vector.shape_cast %13 : vector<1x64x16xbf16> to vector<64x16xbf16>
    %cst_10 = arith.constant dense<0.000000e+00> : vector<16x16xf32>
    %15 = tpu.matmul %12, %14, %cst_10 {dimension_numbers = #tpu.dot_dimension_numbers<[1], [0], [0], [1], [0, 0, 1, 1], [], []>} : vector<16x64xbf16>, vector<64x16xbf16>, vector<16x16xf32> -> vector<16x16xf32>
    %16 = arith.addf %8, %15 : vector<16x16xf32>
    %cst_11 = arith.constant 0.000000e+00 : f32
    %17 = vector.broadcast %cst_11 : f32 to vector<1x64xf32>
    %18 = vector.extract_strided_slice %1 {offsets = [1, 0], sizes = [15, 64], strides = [1, 1]} : vector<16x64xf32> to vector<15x64xf32>
    %19 = tpu.concatenate %18, %17 in 0 : vector<15x64xf32>, vector<1x64xf32> -> vector<16x64xf32>
    %20 = arith.truncf %19 : vector<16x64xf32> to vector<16x64xbf16>
    %c1 = arith.constant 1 : index
    %c0_12 = arith.constant 0 : index
    %c0_13 = arith.constant 0 : index
    %21 = vector.load %arg3[%c1, %c0_12, %c0_13] : memref<2x64x16xbf16, #tpu.memory_space<vmem>>, vector<1x64x16xbf16>
    %22 = vector.shape_cast %21 : vector<1x64x16xbf16> to vector<64x16xbf16>
    %cst_14 = arith.constant dense<0.000000e+00> : vector<16x16xf32>
    %23 = tpu.matmul %20, %22, %cst_14 {dimension_numbers = #tpu.dot_dimension_numbers<[1], [0], [0], [1], [0, 0, 1, 1], [], []>} : vector<16x64xbf16>, vector<64x16xbf16>, vector<16x16xf32> -> vector<16x16xf32>
    %24 = arith.addf %16, %23 : vector<16x16xf32>
    %cst_15 = arith.constant 0.000000e+00 : f32
    %25 = vector.broadcast %cst_15 : f32 to vector<16x16xf32>
    %26 = arith.maximumf %24, %25 : vector<16x16xf32>
    %c0_16 = arith.constant 0 : index
    %c0_17 = arith.constant 0 : index
    %27 = vector.load %arg5[%c0_16, %c0_17] : memref<1x16xf32, #tpu.memory_space<vmem>>, vector<1x16xf32>
    %28 = vector.broadcast %27 : vector<1x16xf32> to vector<16x16xf32>
    %29 = arith.mulf %26, %28 : vector<16x16xf32>
    %c0_18 = arith.constant 0 : index
    %c0_19 = arith.constant 0 : index
    %30 = vector.load %arg6[%c0_18, %c0_19] : memref<1x16xf32, #tpu.memory_space<vmem>>, vector<1x16xf32>
    %31 = vector.broadcast %30 : vector<1x16xf32> to vector<16x16xf32>
    %32 = arith.addf %29, %31 : vector<16x16xf32>
    %33 = vector.extract_strided_slice %4 {offsets = [0, 16], sizes = [16, 16], strides = [1, 1]} : vector<16x64xf32> to vector<16x16xf32>
    %c0_20 = arith.constant 0 : index
    %c0_21 = arith.constant 0 : index
    %34 = vector.load %arg8[%c0_20, %c0_21] : memref<1x16xf32, #tpu.memory_space<vmem>>, vector<1x16xf32>
    %35 = vector.broadcast %34 : vector<1x16xf32> to vector<16x16xf32>
    %36 = arith.addf %33, %35 : vector<16x16xf32>
    %cst_22 = arith.constant 0.000000e+00 : f32
    %37 = vector.broadcast %cst_22 : f32 to vector<2x64xf32>
    %38 = vector.extract_strided_slice %1 {offsets = [0, 0], sizes = [14, 64], strides = [1, 1]} : vector<16x64xf32> to vector<14x64xf32>
    %39 = tpu.concatenate %37, %38 in 0 : vector<2x64xf32>, vector<14x64xf32> -> vector<16x64xf32>
    %40 = arith.truncf %39 : vector<16x64xf32> to vector<16x64xbf16>
    %c0_23 = arith.constant 0 : index
    %c0_24 = arith.constant 0 : index
    %c0_25 = arith.constant 0 : index
    %41 = vector.load %arg7[%c0_23, %c0_24, %c0_25] : memref<2x64x16xbf16, #tpu.memory_space<vmem>>, vector<1x64x16xbf16>
    %42 = vector.shape_cast %41 : vector<1x64x16xbf16> to vector<64x16xbf16>
    %cst_26 = arith.constant dense<0.000000e+00> : vector<16x16xf32>
    %43 = tpu.matmul %40, %42, %cst_26 {dimension_numbers = #tpu.dot_dimension_numbers<[1], [0], [0], [1], [0, 0, 1, 1], [], []>} : vector<16x64xbf16>, vector<64x16xbf16>, vector<16x16xf32> -> vector<16x16xf32>
    %44 = arith.addf %36, %43 : vector<16x16xf32>
    %cst_27 = arith.constant 0.000000e+00 : f32
    %45 = vector.broadcast %cst_27 : f32 to vector<2x64xf32>
    %46 = vector.extract_strided_slice %1 {offsets = [2, 0], sizes = [14, 64], strides = [1, 1]} : vector<16x64xf32> to vector<14x64xf32>
    %47 = tpu.concatenate %46, %45 in 0 : vector<14x64xf32>, vector<2x64xf32> -> vector<16x64xf32>
    %48 = arith.truncf %47 : vector<16x64xf32> to vector<16x64xbf16>
    %c1_28 = arith.constant 1 : index
    %c0_29 = arith.constant 0 : index
    %c0_30 = arith.constant 0 : index
    %49 = vector.load %arg7[%c1_28, %c0_29, %c0_30] : memref<2x64x16xbf16, #tpu.memory_space<vmem>>, vector<1x64x16xbf16>
    %50 = vector.shape_cast %49 : vector<1x64x16xbf16> to vector<64x16xbf16>
    %cst_31 = arith.constant dense<0.000000e+00> : vector<16x16xf32>
    %51 = tpu.matmul %48, %50, %cst_31 {dimension_numbers = #tpu.dot_dimension_numbers<[1], [0], [0], [1], [0, 0, 1, 1], [], []>} : vector<16x64xbf16>, vector<64x16xbf16>, vector<16x16xf32> -> vector<16x16xf32>
    %52 = arith.addf %44, %51 : vector<16x16xf32>
    %cst_32 = arith.constant 0.000000e+00 : f32
    %53 = vector.broadcast %cst_32 : f32 to vector<16x16xf32>
    %54 = arith.maximumf %52, %53 : vector<16x16xf32>
    %c0_33 = arith.constant 0 : index
    %c0_34 = arith.constant 0 : index
    %55 = vector.load %arg9[%c0_33, %c0_34] : memref<1x16xf32, #tpu.memory_space<vmem>>, vector<1x16xf32>
    %56 = vector.broadcast %55 : vector<1x16xf32> to vector<16x16xf32>
    %57 = arith.mulf %54, %56 : vector<16x16xf32>
    %c0_35 = arith.constant 0 : index
    %c0_36 = arith.constant 0 : index
    %58 = vector.load %arg10[%c0_35, %c0_36] : memref<1x16xf32, #tpu.memory_space<vmem>>, vector<1x16xf32>
    %59 = vector.broadcast %58 : vector<1x16xf32> to vector<16x16xf32>
    %60 = arith.addf %57, %59 : vector<16x16xf32>
    %61 = vector.extract_strided_slice %4 {offsets = [0, 32], sizes = [16, 16], strides = [1, 1]} : vector<16x64xf32> to vector<16x16xf32>
    %c0_37 = arith.constant 0 : index
    %c0_38 = arith.constant 0 : index
    %62 = vector.load %arg12[%c0_37, %c0_38] : memref<1x16xf32, #tpu.memory_space<vmem>>, vector<1x16xf32>
    %63 = vector.broadcast %62 : vector<1x16xf32> to vector<16x16xf32>
    %64 = arith.addf %61, %63 : vector<16x16xf32>
    %cst_39 = arith.constant 0.000000e+00 : f32
    %65 = vector.broadcast %cst_39 : f32 to vector<4x64xf32>
    %66 = vector.extract_strided_slice %1 {offsets = [0, 0], sizes = [12, 64], strides = [1, 1]} : vector<16x64xf32> to vector<12x64xf32>
    %67 = tpu.concatenate %65, %66 in 0 : vector<4x64xf32>, vector<12x64xf32> -> vector<16x64xf32>
    %68 = arith.truncf %67 : vector<16x64xf32> to vector<16x64xbf16>
    %c0_40 = arith.constant 0 : index
    %c0_41 = arith.constant 0 : index
    %c0_42 = arith.constant 0 : index
    %69 = vector.load %arg11[%c0_40, %c0_41, %c0_42] : memref<2x64x16xbf16, #tpu.memory_space<vmem>>, vector<1x64x16xbf16>
    %70 = vector.shape_cast %69 : vector<1x64x16xbf16> to vector<64x16xbf16>
    %cst_43 = arith.constant dense<0.000000e+00> : vector<16x16xf32>
    %71 = tpu.matmul %68, %70, %cst_43 {dimension_numbers = #tpu.dot_dimension_numbers<[1], [0], [0], [1], [0, 0, 1, 1], [], []>} : vector<16x64xbf16>, vector<64x16xbf16>, vector<16x16xf32> -> vector<16x16xf32>
    %72 = arith.addf %64, %71 : vector<16x16xf32>
    %cst_44 = arith.constant 0.000000e+00 : f32
    %73 = vector.broadcast %cst_44 : f32 to vector<4x64xf32>
    %74 = vector.extract_strided_slice %1 {offsets = [4, 0], sizes = [12, 64], strides = [1, 1]} : vector<16x64xf32> to vector<12x64xf32>
    %75 = tpu.concatenate %74, %73 in 0 : vector<12x64xf32>, vector<4x64xf32> -> vector<16x64xf32>
    %76 = arith.truncf %75 : vector<16x64xf32> to vector<16x64xbf16>
    %c1_45 = arith.constant 1 : index
    %c0_46 = arith.constant 0 : index
    %c0_47 = arith.constant 0 : index
    %77 = vector.load %arg11[%c1_45, %c0_46, %c0_47] : memref<2x64x16xbf16, #tpu.memory_space<vmem>>, vector<1x64x16xbf16>
    %78 = vector.shape_cast %77 : vector<1x64x16xbf16> to vector<64x16xbf16>
    %cst_48 = arith.constant dense<0.000000e+00> : vector<16x16xf32>
    %79 = tpu.matmul %76, %78, %cst_48 {dimension_numbers = #tpu.dot_dimension_numbers<[1], [0], [0], [1], [0, 0, 1, 1], [], []>} : vector<16x64xbf16>, vector<64x16xbf16>, vector<16x16xf32> -> vector<16x16xf32>
    %80 = arith.addf %72, %79 : vector<16x16xf32>
    %cst_49 = arith.constant 0.000000e+00 : f32
    %81 = vector.broadcast %cst_49 : f32 to vector<16x16xf32>
    %82 = arith.maximumf %80, %81 : vector<16x16xf32>
    %c0_50 = arith.constant 0 : index
    %c0_51 = arith.constant 0 : index
    %83 = vector.load %arg13[%c0_50, %c0_51] : memref<1x16xf32, #tpu.memory_space<vmem>>, vector<1x16xf32>
    %84 = vector.broadcast %83 : vector<1x16xf32> to vector<16x16xf32>
    %85 = arith.mulf %82, %84 : vector<16x16xf32>
    %c0_52 = arith.constant 0 : index
    %c0_53 = arith.constant 0 : index
    %86 = vector.load %arg14[%c0_52, %c0_53] : memref<1x16xf32, #tpu.memory_space<vmem>>, vector<1x16xf32>
    %87 = vector.broadcast %86 : vector<1x16xf32> to vector<16x16xf32>
    %88 = arith.addf %85, %87 : vector<16x16xf32>
    %89 = vector.extract_strided_slice %4 {offsets = [0, 48], sizes = [16, 16], strides = [1, 1]} : vector<16x64xf32> to vector<16x16xf32>
    %cst_54 = arith.constant 0.000000e+00 : f32
    %90 = vector.broadcast %cst_54 : f32 to vector<16x16xf32>
    %91 = arith.maximumf %89, %90 : vector<16x16xf32>
    %92 = arith.truncf %91 : vector<16x16xf32> to vector<16x16xbf16>
    %c0_55 = arith.constant 0 : index
    %c0_56 = arith.constant 0 : index
    %93 = vector.load %arg15[%c0_55, %c0_56] : memref<16x8xbf16, #tpu.memory_space<vmem>>, vector<16x8xbf16>
    %cst_57 = arith.constant dense<0.000000e+00> : vector<16x8xf32>
    %94 = tpu.matmul %92, %93, %cst_57 {dimension_numbers = #tpu.dot_dimension_numbers<[1], [0], [0], [1], [0, 0, 1, 1], [], []>} : vector<16x16xbf16>, vector<16x8xbf16>, vector<16x8xf32> -> vector<16x8xf32>
    %c0_58 = arith.constant 0 : index
    %c0_59 = arith.constant 0 : index
    %95 = vector.load %arg16[%c0_58, %c0_59] : memref<1x8xf32, #tpu.memory_space<vmem>>, vector<1x8xf32>
    %96 = vector.broadcast %95 : vector<1x8xf32> to vector<16x8xf32>
    %97 = arith.addf %94, %96 : vector<16x8xf32>
    %c0_60 = arith.constant 0 : index
    %c0_61 = arith.constant 0 : index
    %98 = vector.load %arg17[%c0_60, %c0_61] : memref<16x8xbf16, #tpu.memory_space<vmem>>, vector<16x8xbf16>
    %cst_62 = arith.constant dense<0.000000e+00> : vector<16x8xf32>
    %99 = tpu.matmul %92, %98, %cst_62 {dimension_numbers = #tpu.dot_dimension_numbers<[1], [0], [0], [1], [0, 0, 1, 1], [], []>} : vector<16x16xbf16>, vector<16x8xbf16>, vector<16x8xf32> -> vector<16x8xf32>
    %c0_63 = arith.constant 0 : index
    %c0_64 = arith.constant 0 : index
    %100 = vector.load %arg18[%c0_63, %c0_64] : memref<1x8xf32, #tpu.memory_space<vmem>>, vector<1x8xf32>
    %101 = vector.broadcast %100 : vector<1x8xf32> to vector<16x8xf32>
    %102 = arith.addf %99, %101 : vector<16x8xf32>
    %c0_65 = arith.constant 0 : index
    %c0_66 = arith.constant 0 : index
    %103 = vector.load %arg19[%c0_65, %c0_66] : memref<16x8xbf16, #tpu.memory_space<vmem>>, vector<16x8xbf16>
    %cst_67 = arith.constant dense<0.000000e+00> : vector<16x8xf32>
    %104 = tpu.matmul %92, %103, %cst_67 {dimension_numbers = #tpu.dot_dimension_numbers<[1], [0], [0], [1], [0, 0, 1, 1], [], []>} : vector<16x16xbf16>, vector<16x8xbf16>, vector<16x8xf32> -> vector<16x8xf32>
    %c0_68 = arith.constant 0 : index
    %c0_69 = arith.constant 0 : index
    %105 = vector.load %arg20[%c0_68, %c0_69] : memref<1x8xf32, #tpu.memory_space<vmem>>, vector<1x8xf32>
    %106 = vector.broadcast %105 : vector<1x8xf32> to vector<16x8xf32>
    %107 = arith.addf %104, %106 : vector<16x8xf32>
    %108 = tpu.transpose %107, [1, 0] : vector<16x8xf32> -> vector<8x16xf32>
    %109 = arith.truncf %108 : vector<8x16xf32> to vector<8x16xbf16>
    %110 = arith.truncf %97 : vector<16x8xf32> to vector<16x8xbf16>
    %cst_70 = arith.constant dense<0.000000e+00> : vector<8x8xf32>
    %111 = tpu.matmul %109, %110, %cst_70 {dimension_numbers = #tpu.dot_dimension_numbers<[1], [0], [0], [1], [0, 0, 1, 1], [], []>} : vector<8x16xbf16>, vector<16x8xbf16>, vector<8x8xf32> -> vector<8x8xf32>
    %112 = arith.truncf %102 : vector<16x8xf32> to vector<16x8xbf16>
    %113 = arith.truncf %111 : vector<8x8xf32> to vector<8x8xbf16>
    %cst_71 = arith.constant dense<0.000000e+00> : vector<16x8xf32>
    %114 = tpu.matmul %112, %113, %cst_71 {dimension_numbers = #tpu.dot_dimension_numbers<[1], [0], [0], [1], [0, 0, 1, 1], [], []>} : vector<16x8xbf16>, vector<8x8xbf16>, vector<16x8xf32> -> vector<16x8xf32>
    %cst_72 = arith.constant 6.250000e-02 : f32
    %115 = vector.broadcast %cst_72 : f32 to vector<16x8xf32>
    %116 = arith.mulf %114, %115 : vector<16x8xf32>
    %117 = arith.truncf %116 : vector<16x8xf32> to vector<16x8xbf16>
    %c0_73 = arith.constant 0 : index
    %c0_74 = arith.constant 0 : index
    %118 = vector.load %arg21[%c0_73, %c0_74] : memref<8x16xbf16, #tpu.memory_space<vmem>>, vector<8x16xbf16>
    %cst_75 = arith.constant dense<0.000000e+00> : vector<16x16xf32>
    %119 = tpu.matmul %117, %118, %cst_75 {dimension_numbers = #tpu.dot_dimension_numbers<[1], [0], [0], [1], [0, 0, 1, 1], [], []>} : vector<16x8xbf16>, vector<8x16xbf16>, vector<16x16xf32> -> vector<16x16xf32>
    %c0_76 = arith.constant 0 : index
    %c0_77 = arith.constant 0 : index
    %120 = vector.load %arg22[%c0_76, %c0_77] : memref<1x16xf32, #tpu.memory_space<vmem>>, vector<1x16xf32>
    %121 = vector.broadcast %120 : vector<1x16xf32> to vector<16x16xf32>
    %122 = arith.addf %119, %121 : vector<16x16xf32>
    %c0_78 = arith.constant 0 : index
    %c0_79 = arith.constant 0 : index
    %123 = vector.load %arg23[%c0_78, %c0_79] : memref<1x16xf32, #tpu.memory_space<vmem>>, vector<1x16xf32>
    %124 = vector.broadcast %123 : vector<1x16xf32> to vector<16x16xf32>
    %125 = arith.mulf %122, %124 : vector<16x16xf32>
    %c0_80 = arith.constant 0 : index
    %c0_81 = arith.constant 0 : index
    %126 = vector.load %arg24[%c0_80, %c0_81] : memref<1x16xf32, #tpu.memory_space<vmem>>, vector<1x16xf32>
    %127 = vector.broadcast %126 : vector<1x16xf32> to vector<16x16xf32>
    %128 = arith.addf %125, %127 : vector<16x16xf32>
    %129 = arith.addf %128, %91 : vector<16x16xf32>
    %cst_82 = arith.constant 0.000000e+00 : f32
    %130 = vector.broadcast %cst_82 : f32 to vector<16x64xf32>
    %cst_83 = arith.constant 0.000000e+00 : f32
    %131 = vector.broadcast %cst_83 : f32 to vector<1x16xf32>
    %132 = vector.extract_strided_slice %32 {offsets = [0, 0], sizes = [15, 16], strides = [1, 1]} : vector<16x16xf32> to vector<15x16xf32>
    %133 = tpu.concatenate %131, %132 in 0 : vector<1x16xf32>, vector<15x16xf32> -> vector<16x16xf32>
    %134 = arith.truncf %133 : vector<16x16xf32> to vector<16x16xbf16>
    %c0_84 = arith.constant 0 : index
    %c0_85 = arith.constant 0 : index
    %c0_86 = arith.constant 0 : index
    %c0_87 = arith.constant 0 : index
    %135 = vector.load %arg25[%c0_84, %c0_85, %c0_86, %c0_87] : memref<3x4x16x64xbf16, #tpu.memory_space<vmem>>, vector<1x1x16x64xbf16>
    %136 = vector.shape_cast %135 : vector<1x1x16x64xbf16> to vector<16x64xbf16>
    %cst_88 = arith.constant dense<0.000000e+00> : vector<16x64xf32>
    %137 = tpu.matmul %134, %136, %cst_88 {dimension_numbers = #tpu.dot_dimension_numbers<[1], [0], [0], [1], [0, 0, 1, 1], [], []>} : vector<16x16xbf16>, vector<16x64xbf16>, vector<16x64xf32> -> vector<16x64xf32>
    %138 = arith.addf %130, %137 : vector<16x64xf32>
    %139 = arith.truncf %32 : vector<16x16xf32> to vector<16x16xbf16>
    %c1_89 = arith.constant 1 : index
    %c0_90 = arith.constant 0 : index
    %c0_91 = arith.constant 0 : index
    %c0_92 = arith.constant 0 : index
    %140 = vector.load %arg25[%c1_89, %c0_90, %c0_91, %c0_92] : memref<3x4x16x64xbf16, #tpu.memory_space<vmem>>, vector<1x1x16x64xbf16>
    %141 = vector.shape_cast %140 : vector<1x1x16x64xbf16> to vector<16x64xbf16>
    %cst_93 = arith.constant dense<0.000000e+00> : vector<16x64xf32>
    %142 = tpu.matmul %139, %141, %cst_93 {dimension_numbers = #tpu.dot_dimension_numbers<[1], [0], [0], [1], [0, 0, 1, 1], [], []>} : vector<16x16xbf16>, vector<16x64xbf16>, vector<16x64xf32> -> vector<16x64xf32>
    %143 = arith.addf %138, %142 : vector<16x64xf32>
    %cst_94 = arith.constant 0.000000e+00 : f32
    %144 = vector.broadcast %cst_94 : f32 to vector<1x16xf32>
    %145 = vector.extract_strided_slice %32 {offsets = [1, 0], sizes = [15, 16], strides = [1, 1]} : vector<16x16xf32> to vector<15x16xf32>
    %146 = tpu.concatenate %145, %144 in 0 : vector<15x16xf32>, vector<1x16xf32> -> vector<16x16xf32>
    %147 = arith.truncf %146 : vector<16x16xf32> to vector<16x16xbf16>
    %c2 = arith.constant 2 : index
    %c0_95 = arith.constant 0 : index
    %c0_96 = arith.constant 0 : index
    %c0_97 = arith.constant 0 : index
    %148 = vector.load %arg25[%c2, %c0_95, %c0_96, %c0_97] : memref<3x4x16x64xbf16, #tpu.memory_space<vmem>>, vector<1x1x16x64xbf16>
    %149 = vector.shape_cast %148 : vector<1x1x16x64xbf16> to vector<16x64xbf16>
    %cst_98 = arith.constant dense<0.000000e+00> : vector<16x64xf32>
    %150 = tpu.matmul %147, %149, %cst_98 {dimension_numbers = #tpu.dot_dimension_numbers<[1], [0], [0], [1], [0, 0, 1, 1], [], []>} : vector<16x16xbf16>, vector<16x64xbf16>, vector<16x64xf32> -> vector<16x64xf32>
    %151 = arith.addf %143, %150 : vector<16x64xf32>
    %cst_99 = arith.constant 0.000000e+00 : f32
    %152 = vector.broadcast %cst_99 : f32 to vector<1x16xf32>
    %153 = vector.extract_strided_slice %60 {offsets = [0, 0], sizes = [15, 16], strides = [1, 1]} : vector<16x16xf32> to vector<15x16xf32>
    %154 = tpu.concatenate %152, %153 in 0 : vector<1x16xf32>, vector<15x16xf32> -> vector<16x16xf32>
    %155 = arith.truncf %154 : vector<16x16xf32> to vector<16x16xbf16>
    %c0_100 = arith.constant 0 : index
    %c1_101 = arith.constant 1 : index
    %c0_102 = arith.constant 0 : index
    %c0_103 = arith.constant 0 : index
    %156 = vector.load %arg25[%c0_100, %c1_101, %c0_102, %c0_103] : memref<3x4x16x64xbf16, #tpu.memory_space<vmem>>, vector<1x1x16x64xbf16>
    %157 = vector.shape_cast %156 : vector<1x1x16x64xbf16> to vector<16x64xbf16>
    %cst_104 = arith.constant dense<0.000000e+00> : vector<16x64xf32>
    %158 = tpu.matmul %155, %157, %cst_104 {dimension_numbers = #tpu.dot_dimension_numbers<[1], [0], [0], [1], [0, 0, 1, 1], [], []>} : vector<16x16xbf16>, vector<16x64xbf16>, vector<16x64xf32> -> vector<16x64xf32>
    %159 = arith.addf %151, %158 : vector<16x64xf32>
    %160 = arith.truncf %60 : vector<16x16xf32> to vector<16x16xbf16>
    %c1_105 = arith.constant 1 : index
    %c1_106 = arith.constant 1 : index
    %c0_107 = arith.constant 0 : index
    %c0_108 = arith.constant 0 : index
    %161 = vector.load %arg25[%c1_105, %c1_106, %c0_107, %c0_108] : memref<3x4x16x64xbf16, #tpu.memory_space<vmem>>, vector<1x1x16x64xbf16>
    %162 = vector.shape_cast %161 : vector<1x1x16x64xbf16> to vector<16x64xbf16>
    %cst_109 = arith.constant dense<0.000000e+00> : vector<16x64xf32>
    %163 = tpu.matmul %160, %162, %cst_109 {dimension_numbers = #tpu.dot_dimension_numbers<[1], [0], [0], [1], [0, 0, 1, 1], [], []>} : vector<16x16xbf16>, vector<16x64xbf16>, vector<16x64xf32> -> vector<16x64xf32>
    %164 = arith.addf %159, %163 : vector<16x64xf32>
    %cst_110 = arith.constant 0.000000e+00 : f32
    %165 = vector.broadcast %cst_110 : f32 to vector<1x16xf32>
    %166 = vector.extract_strided_slice %60 {offsets = [1, 0], sizes = [15, 16], strides = [1, 1]} : vector<16x16xf32> to vector<15x16xf32>
    %167 = tpu.concatenate %166, %165 in 0 : vector<15x16xf32>, vector<1x16xf32> -> vector<16x16xf32>
    %168 = arith.truncf %167 : vector<16x16xf32> to vector<16x16xbf16>
    %c2_111 = arith.constant 2 : index
    %c1_112 = arith.constant 1 : index
    %c0_113 = arith.constant 0 : index
    %c0_114 = arith.constant 0 : index
    %169 = vector.load %arg25[%c2_111, %c1_112, %c0_113, %c0_114] : memref<3x4x16x64xbf16, #tpu.memory_space<vmem>>, vector<1x1x16x64xbf16>
    %170 = vector.shape_cast %169 : vector<1x1x16x64xbf16> to vector<16x64xbf16>
    %cst_115 = arith.constant dense<0.000000e+00> : vector<16x64xf32>
    %171 = tpu.matmul %168, %170, %cst_115 {dimension_numbers = #tpu.dot_dimension_numbers<[1], [0], [0], [1], [0, 0, 1, 1], [], []>} : vector<16x16xbf16>, vector<16x64xbf16>, vector<16x64xf32> -> vector<16x64xf32>
    %172 = arith.addf %164, %171 : vector<16x64xf32>
    %cst_116 = arith.constant 0.000000e+00 : f32
    %173 = vector.broadcast %cst_116 : f32 to vector<1x16xf32>
    %174 = vector.extract_strided_slice %88 {offsets = [0, 0], sizes = [15, 16], strides = [1, 1]} : vector<16x16xf32> to vector<15x16xf32>
    %175 = tpu.concatenate %173, %174 in 0 : vector<1x16xf32>, vector<15x16xf32> -> vector<16x16xf32>
    %176 = arith.truncf %175 : vector<16x16xf32> to vector<16x16xbf16>
    %c0_117 = arith.constant 0 : index
    %c2_118 = arith.constant 2 : index
    %c0_119 = arith.constant 0 : index
    %c0_120 = arith.constant 0 : index
    %177 = vector.load %arg25[%c0_117, %c2_118, %c0_119, %c0_120] : memref<3x4x16x64xbf16, #tpu.memory_space<vmem>>, vector<1x1x16x64xbf16>
    %178 = vector.shape_cast %177 : vector<1x1x16x64xbf16> to vector<16x64xbf16>
    %cst_121 = arith.constant dense<0.000000e+00> : vector<16x64xf32>
    %179 = tpu.matmul %176, %178, %cst_121 {dimension_numbers = #tpu.dot_dimension_numbers<[1], [0], [0], [1], [0, 0, 1, 1], [], []>} : vector<16x16xbf16>, vector<16x64xbf16>, vector<16x64xf32> -> vector<16x64xf32>
    %180 = arith.addf %172, %179 : vector<16x64xf32>
    %181 = arith.truncf %88 : vector<16x16xf32> to vector<16x16xbf16>
    %c1_122 = arith.constant 1 : index
    %c2_123 = arith.constant 2 : index
    %c0_124 = arith.constant 0 : index
    %c0_125 = arith.constant 0 : index
    %182 = vector.load %arg25[%c1_122, %c2_123, %c0_124, %c0_125] : memref<3x4x16x64xbf16, #tpu.memory_space<vmem>>, vector<1x1x16x64xbf16>
    %183 = vector.shape_cast %182 : vector<1x1x16x64xbf16> to vector<16x64xbf16>
    %cst_126 = arith.constant dense<0.000000e+00> : vector<16x64xf32>
    %184 = tpu.matmul %181, %183, %cst_126 {dimension_numbers = #tpu.dot_dimension_numbers<[1], [0], [0], [1], [0, 0, 1, 1], [], []>} : vector<16x16xbf16>, vector<16x64xbf16>, vector<16x64xf32> -> vector<16x64xf32>
    %185 = arith.addf %180, %184 : vector<16x64xf32>
    %cst_127 = arith.constant 0.000000e+00 : f32
    %186 = vector.broadcast %cst_127 : f32 to vector<1x16xf32>
    %187 = vector.extract_strided_slice %88 {offsets = [1, 0], sizes = [15, 16], strides = [1, 1]} : vector<16x16xf32> to vector<15x16xf32>
    %188 = tpu.concatenate %187, %186 in 0 : vector<15x16xf32>, vector<1x16xf32> -> vector<16x16xf32>
    %189 = arith.truncf %188 : vector<16x16xf32> to vector<16x16xbf16>
    %c2_128 = arith.constant 2 : index
    %c2_129 = arith.constant 2 : index
    %c0_130 = arith.constant 0 : index
    %c0_131 = arith.constant 0 : index
    %190 = vector.load %arg25[%c2_128, %c2_129, %c0_130, %c0_131] : memref<3x4x16x64xbf16, #tpu.memory_space<vmem>>, vector<1x1x16x64xbf16>
    %191 = vector.shape_cast %190 : vector<1x1x16x64xbf16> to vector<16x64xbf16>
    %cst_132 = arith.constant dense<0.000000e+00> : vector<16x64xf32>
    %192 = tpu.matmul %189, %191, %cst_132 {dimension_numbers = #tpu.dot_dimension_numbers<[1], [0], [0], [1], [0, 0, 1, 1], [], []>} : vector<16x16xbf16>, vector<16x64xbf16>, vector<16x64xf32> -> vector<16x64xf32>
    %193 = arith.addf %185, %192 : vector<16x64xf32>
    %cst_133 = arith.constant 0.000000e+00 : f32
    %194 = vector.broadcast %cst_133 : f32 to vector<1x16xf32>
    %195 = vector.extract_strided_slice %129 {offsets = [0, 0], sizes = [15, 16], strides = [1, 1]} : vector<16x16xf32> to vector<15x16xf32>
    %196 = tpu.concatenate %194, %195 in 0 : vector<1x16xf32>, vector<15x16xf32> -> vector<16x16xf32>
    %197 = arith.truncf %196 : vector<16x16xf32> to vector<16x16xbf16>
    %c0_134 = arith.constant 0 : index
    %c3 = arith.constant 3 : index
    %c0_135 = arith.constant 0 : index
    %c0_136 = arith.constant 0 : index
    %198 = vector.load %arg25[%c0_134, %c3, %c0_135, %c0_136] : memref<3x4x16x64xbf16, #tpu.memory_space<vmem>>, vector<1x1x16x64xbf16>
    %199 = vector.shape_cast %198 : vector<1x1x16x64xbf16> to vector<16x64xbf16>
    %cst_137 = arith.constant dense<0.000000e+00> : vector<16x64xf32>
    %200 = tpu.matmul %197, %199, %cst_137 {dimension_numbers = #tpu.dot_dimension_numbers<[1], [0], [0], [1], [0, 0, 1, 1], [], []>} : vector<16x16xbf16>, vector<16x64xbf16>, vector<16x64xf32> -> vector<16x64xf32>
    %201 = arith.addf %193, %200 : vector<16x64xf32>
    %202 = arith.truncf %129 : vector<16x16xf32> to vector<16x16xbf16>
    %c1_138 = arith.constant 1 : index
    %c3_139 = arith.constant 3 : index
    %c0_140 = arith.constant 0 : index
    %c0_141 = arith.constant 0 : index
    %203 = vector.load %arg25[%c1_138, %c3_139, %c0_140, %c0_141] : memref<3x4x16x64xbf16, #tpu.memory_space<vmem>>, vector<1x1x16x64xbf16>
    %204 = vector.shape_cast %203 : vector<1x1x16x64xbf16> to vector<16x64xbf16>
    %cst_142 = arith.constant dense<0.000000e+00> : vector<16x64xf32>
    %205 = tpu.matmul %202, %204, %cst_142 {dimension_numbers = #tpu.dot_dimension_numbers<[1], [0], [0], [1], [0, 0, 1, 1], [], []>} : vector<16x16xbf16>, vector<16x64xbf16>, vector<16x64xf32> -> vector<16x64xf32>
    %206 = arith.addf %201, %205 : vector<16x64xf32>
    %cst_143 = arith.constant 0.000000e+00 : f32
    %207 = vector.broadcast %cst_143 : f32 to vector<1x16xf32>
    %208 = vector.extract_strided_slice %129 {offsets = [1, 0], sizes = [15, 16], strides = [1, 1]} : vector<16x16xf32> to vector<15x16xf32>
    %209 = tpu.concatenate %208, %207 in 0 : vector<15x16xf32>, vector<1x16xf32> -> vector<16x16xf32>
    %210 = arith.truncf %209 : vector<16x16xf32> to vector<16x16xbf16>
    %c2_144 = arith.constant 2 : index
    %c3_145 = arith.constant 3 : index
    %c0_146 = arith.constant 0 : index
    %c0_147 = arith.constant 0 : index
    %211 = vector.load %arg25[%c2_144, %c3_145, %c0_146, %c0_147] : memref<3x4x16x64xbf16, #tpu.memory_space<vmem>>, vector<1x1x16x64xbf16>
    %212 = vector.shape_cast %211 : vector<1x1x16x64xbf16> to vector<16x64xbf16>
    %cst_148 = arith.constant dense<0.000000e+00> : vector<16x64xf32>
    %213 = tpu.matmul %210, %212, %cst_148 {dimension_numbers = #tpu.dot_dimension_numbers<[1], [0], [0], [1], [0, 0, 1, 1], [], []>} : vector<16x16xbf16>, vector<16x64xbf16>, vector<16x64xf32> -> vector<16x64xf32>
    %214 = arith.addf %206, %213 : vector<16x64xf32>
    %cst_149 = arith.constant 0.000000e+00 : f32
    %215 = vector.broadcast %cst_149 : f32 to vector<16x64xf32>
    %216 = arith.maximumf %214, %215 : vector<16x64xf32>
    %c0_150 = arith.constant 0 : index
    %c0_151 = arith.constant 0 : index
    %217 = vector.load %arg26[%c0_150, %c0_151] : memref<1x64xf32, #tpu.memory_space<vmem>>, vector<1x64xf32>
    %218 = vector.broadcast %217 : vector<1x64xf32> to vector<16x64xf32>
    %219 = arith.mulf %216, %218 : vector<16x64xf32>
    %c0_152 = arith.constant 0 : index
    %c0_153 = arith.constant 0 : index
    %220 = vector.load %arg27[%c0_152, %c0_153] : memref<1x64xf32, #tpu.memory_space<vmem>>, vector<1x64xf32>
    %221 = vector.broadcast %220 : vector<1x64xf32> to vector<16x64xf32>
    %222 = arith.addf %219, %221 : vector<16x64xf32>
    %223 = arith.addf %222, %1 : vector<16x64xf32>
    %c0_154 = arith.constant 0 : index
    %c0_155 = arith.constant 0 : index
    %c0_156 = arith.constant 0 : index
    %224 = vector.load %arg28[%c0_154, %c0_155, %c0_156] : memref<1x16x64xf32, #tpu.memory_space<vmem>>, vector<1x16x64xf32>
    %225 = vector.shape_cast %224 : vector<1x16x64xf32> to vector<16x64xf32>
    %226 = vector.shape_cast %223 : vector<16x64xf32> to vector<1x16x64xf32>
    tpu.vector_store %arg28[%c0_154, %c0_155, %c0_156], %226 {strides = array<i32>} : memref<1x16x64xf32, #tpu.memory_space<vmem>>, vector<1x16x64xf32>,
    return
  }
  func.func @transform_0(%arg0: i32) -> (i32, i32, i32) {
    %c0_i32 = arith.constant 0 : i32
    %c0_i32_0 = arith.constant 0 : i32
    %c0_i32_1 = arith.constant 0 : i32
    return %arg0, %c0_i32, %c0_i32_0 : i32, i32, i32
  }
  func.func @transform_1(%arg0: i32) -> (i32, i32) {
    %c0_i32 = arith.constant 0 : i32
    %c0_i32_0 = arith.constant 0 : i32
    %c0_i32_1 = arith.constant 0 : i32
    return %c0_i32, %c0_i32_0 : i32, i32
  }
  func.func @transform_2(%arg0: i32) -> (i32, i32, i32) {
    %c0_i32 = arith.constant 0 : i32
    %c0_i32_0 = arith.constant 0 : i32
    %c0_i32_1 = arith.constant 0 : i32
    %c0_i32_2 = arith.constant 0 : i32
    return %c0_i32, %c0_i32_0, %c0_i32_1 : i32, i32, i32
  }
  func.func @transform_3(%arg0: i32) -> (i32, i32) {
    %c0_i32 = arith.constant 0 : i32
    %c0_i32_0 = arith.constant 0 : i32
    %c0_i32_1 = arith.constant 0 : i32
    return %c0_i32, %c0_i32_0 : i32, i32
  }
  func.func @transform_4(%arg0: i32) -> (i32, i32) {
    %c0_i32 = arith.constant 0 : i32
    %c0_i32_0 = arith.constant 0 : i32
    %c0_i32_1 = arith.constant 0 : i32
    return %c0_i32, %c0_i32_0 : i32, i32
  }
  func.func @transform_5(%arg0: i32) -> (i32, i32) {
    %c0_i32 = arith.constant 0 : i32
    %c0_i32_0 = arith.constant 0 : i32
    %c0_i32_1 = arith.constant 0 : i32
    return %c0_i32, %c0_i32_0 : i32, i32
  }
  func.func @transform_6(%arg0: i32) -> (i32, i32, i32) {
    %c0_i32 = arith.constant 0 : i32
    %c0_i32_0 = arith.constant 0 : i32
    %c0_i32_1 = arith.constant 0 : i32
    %c0_i32_2 = arith.constant 0 : i32
    return %c0_i32, %c0_i32_0, %c0_i32_1 : i32, i32, i32
  }
  func.func @transform_7(%arg0: i32) -> (i32, i32) {
    %c0_i32 = arith.constant 0 : i32
    %c0_i32_0 = arith.constant 0 : i32
    %c0_i32_1 = arith.constant 0 : i32
    return %c0_i32, %c0_i32_0 : i32, i32
  }
  func.func @transform_8(%arg0: i32) -> (i32, i32) {
    %c0_i32 = arith.constant 0 : i32
    %c0_i32_0 = arith.constant 0 : i32
    %c0_i32_1 = arith.constant 0 : i32
    return %c0_i32, %c0_i32_0 : i32, i32
  }
  func.func @transform_9(%arg0: i32) -> (i32, i32) {
    %c0_i32 = arith.constant 0 : i32
    %c0_i32_0 = arith.constant 0 : i32
    %c0_i32_1 = arith.constant 0 : i32
    return %c0_i32, %c0_i32_0 : i32, i32
  }
  func.func @transform_10(%arg0: i32) -> (i32, i32, i32) {
    %c0_i32 = arith.constant 0 : i32
    %c0_i32_0 = arith.constant 0 : i32
    %c0_i32_1 = arith.constant 0 : i32
    %c0_i32_2 = arith.constant 0 : i32
    return %c0_i32, %c0_i32_0, %c0_i32_1 : i32, i32, i32
  }
  func.func @transform_11(%arg0: i32) -> (i32, i32) {
    %c0_i32 = arith.constant 0 : i32
    %c0_i32_0 = arith.constant 0 : i32
    %c0_i32_1 = arith.constant 0 : i32
    return %c0_i32, %c0_i32_0 : i32, i32
  }
  func.func @transform_12(%arg0: i32) -> (i32, i32) {
    %c0_i32 = arith.constant 0 : i32
    %c0_i32_0 = arith.constant 0 : i32
    %c0_i32_1 = arith.constant 0 : i32
    return %c0_i32, %c0_i32_0 : i32, i32
  }
  func.func @transform_13(%arg0: i32) -> (i32, i32) {
    %c0_i32 = arith.constant 0 : i32
    %c0_i32_0 = arith.constant 0 : i32
    %c0_i32_1 = arith.constant 0 : i32
    return %c0_i32, %c0_i32_0 : i32, i32
  }
  func.func @transform_14(%arg0: i32) -> (i32, i32) {
    %c0_i32 = arith.constant 0 : i32
    %c0_i32_0 = arith.constant 0 : i32
    %c0_i32_1 = arith.constant 0 : i32
    return %c0_i32, %c0_i32_0 : i32, i32
  }
  func.func @transform_15(%arg0: i32) -> (i32, i32) {
    %c0_i32 = arith.constant 0 : i32
    %c0_i32_0 = arith.constant 0 : i32
    %c0_i32_1 = arith.constant 0 : i32
    return %c0_i32, %c0_i32_0 : i32, i32
  }
  func.func @transform_16(%arg0: i32) -> (i32, i32) {
    %c0_i32 = arith.constant 0 : i32
    %c0_i32_0 = arith.constant 0 : i32
    %c0_i32_1 = arith.constant 0 : i32
    return %c0_i32, %c0_i32_0 : i32, i32
  }
  func.func @transform_17(%arg0: i32) -> (i32, i32) {
    %c0_i32 = arith.constant 0 : i32
    %c0_i32_0 = arith.constant 0 : i32
    %c0_i32_1 = arith.constant 0 : i32
    return %c0_i32, %c0_i32_0 : i32, i32
  }
  func.func @transform_18(%arg0: i32) -> (i32, i32) {
    %c0_i32 = arith.constant 0 : i32
    %c0_i32_0 = arith.constant 0 : i32
    %c0_i32_1 = arith.constant 0 : i32
    return %c0_i32, %c0_i32_0 : i32, i32
  }
  func.func @transform_19(%arg0: i32) -> (i32, i32) {
    %c0_i32 = arith.constant 0 : i32
    %c0_i32_0 = arith.constant 0 : i32
    %c0_i32_1 = arith.constant 0 : i32
    return %c0_i32, %c0_i32_0 : i32, i32
  }
  func.func @transform_20(%arg0: i32) -> (i32, i32) {
    %c0_i32 = arith.constant 0 : i32
    %c0_i32_0 = arith.constant 0 : i32
    %c0_i32_1 = arith.constant 0 : i32
    return %c0_i32, %c0_i32_0 : i32, i32
  }
  func.func @transform_21(%arg0: i32) -> (i32, i32) {
    %c0_i32 = arith.constant 0 : i32
    %c0_i32_0 = arith.constant 0 : i32
    %c0_i32_1 = arith.constant 0 : i32
    return %c0_i32, %c0_i32_0 : i32, i32
  }
  func.func @transform_22(%arg0: i32) -> (i32, i32) {
    %c0_i32 = arith.constant 0 : i32
    %c0_i32_0 = arith.constant 0 : i32
    %c0_i32_1 = arith.constant 0 : i32
    return %c0_i32, %c0_i32_0 : i32, i32
  }
  func.func @transform_23(%arg0: i32) -> (i32, i32) {
    %c0_i32 = arith.constant 0 : i32
    %c0_i32_0 = arith.constant 0 : i32
    %c0_i32_1 = arith.constant 0 : i32
    return %c0_i32, %c0_i32_0 : i32, i32
  }
  func.func @transform_24(%arg0: i32) -> (i32, i32, i32, i32) {
    %c0_i32 = arith.constant 0 : i32
    %c0_i32_0 = arith.constant 0 : i32
    %c0_i32_1 = arith.constant 0 : i32
    %c0_i32_2 = arith.constant 0 : i32
    %c0_i32_3 = arith.constant 0 : i32
    return %c0_i32, %c0_i32_0, %c0_i32_1, %c0_i32_2 : i32, i32, i32, i32
  }
  func.func @transform_25(%arg0: i32) -> (i32, i32) {
    %c0_i32 = arith.constant 0 : i32
    %c0_i32_0 = arith.constant 0 : i32
    %c0_i32_1 = arith.constant 0 : i32
    return %c0_i32, %c0_i32_0 : i32, i32
  }
  func.func @transform_26(%arg0: i32) -> (i32, i32) {
    %c0_i32 = arith.constant 0 : i32
    %c0_i32_0 = arith.constant 0 : i32
    %c0_i32_1 = arith.constant 0 : i32
    return %c0_i32, %c0_i32_0 : i32, i32
  }
  func.func @transform_27(%arg0: i32) -> (i32, i32, i32) {
    %c0_i32 = arith.constant 0 : i32
    %c0_i32_0 = arith.constant 0 : i32
    %c0_i32_1 = arith.constant 0 : i32
    return %arg0, %c0_i32, %c0_i32_0 : i32, i32, i32
  }
}

</mosaic_0001>

<llo_original>
// kernel: tpu_custom_call.1
$region0: #{tpu_custom_call.1}
  #allocation0 [shape = 'u32[]', space=smem, size = 0x4, offset = 0x4, fixed_abs, tag = 'smem constant byte address 0x4 - core index']
  #allocation1 [shape = 'u32[72,128]{1,0:T(1,128)}', space=vmem, size = 0x9000, scoped, tag = 'internal scratch']
  %s0 = inlined_call_operand.vmem [shape: f32[2,16,64], index: 0, kind: input, shape index: {}]
  %s1 = inlined_call_operand.vmem [shape: bf16[64,64], index: 1, kind: input, shape index: {}]
  %s2 = inlined_call_operand.vmem [shape: bf16[2,64,16], index: 2, kind: input, shape index: {}]
  %s3 = inlined_call_operand.vmem [shape: f32[1,16], index: 3, kind: input, shape index: {}]
  %s4 = inlined_call_operand.vmem [shape: f32[1,16], index: 4, kind: input, shape index: {}]
  %s5 = inlined_call_operand.vmem [shape: f32[1,16], index: 5, kind: input, shape index: {}]
  %s6 = inlined_call_operand.vmem [shape: bf16[2,64,16], index: 6, kind: input, shape index: {}]
  %s7 = inlined_call_operand.vmem [shape: f32[1,16], index: 7, kind: input, shape index: {}]
  %s8 = inlined_call_operand.vmem [shape: f32[1,16], index: 8, kind: input, shape index: {}]
  %s9 = inlined_call_operand.vmem [shape: f32[1,16], index: 9, kind: input, shape index: {}]
  %s10 = inlined_call_operand.vmem [shape: bf16[2,64,16], index: 10, kind: input, shape index: {}]
  %s11 = inlined_call_operand.vmem [shape: f32[1,16], index: 11, kind: input, shape index: {}]
  %s12 = inlined_call_operand.vmem [shape: f32[1,16], index: 12, kind: input, shape index: {}]
  %s13 = inlined_call_operand.vmem [shape: f32[1,16], index: 13, kind: input, shape index: {}]
  %s14 = inlined_call_operand.vmem [shape: bf16[16,8], index: 14, kind: input, shape index: {}]
  %s15 = inlined_call_operand.vmem [shape: f32[1,8], index: 15, kind: input, shape index: {}]
  %s16 = inlined_call_operand.vmem [shape: bf16[16,8], index: 16, kind: input, shape index: {}]
  %s17 = inlined_call_operand.vmem [shape: f32[1,8], index: 17, kind: input, shape index: {}]
  %s18 = inlined_call_operand.vmem [shape: bf16[16,8], index: 18, kind: input, shape index: {}]
  %s19 = inlined_call_operand.vmem [shape: f32[1,8], index: 19, kind: input, shape index: {}]
  %s20 = inlined_call_operand.vmem [shape: bf16[8,16], index: 20, kind: input, shape index: {}]
  %s21 = inlined_call_operand.vmem [shape: f32[1,16], index: 21, kind: input, shape index: {}]
  %s22 = inlined_call_operand.vmem [shape: f32[1,16], index: 22, kind: input, shape index: {}]
  %s23 = inlined_call_operand.vmem [shape: f32[1,16], index: 23, kind: input, shape index: {}]
  %s24 = inlined_call_operand.vmem [shape: bf16[3,4,16,64], index: 24, kind: input, shape index: {}]
  %s25 = inlined_call_operand.vmem [shape: f32[1,64], index: 25, kind: input, shape index: {}]
  %s26 = inlined_call_operand.vmem [shape: f32[1,64], index: 26, kind: input, shape index: {}]
  %s27 = inlined_call_operand.hbm [shape: f32[2,16,64], index: 27, kind: output, shape index: {}]
  %s28 = sld [smem:[#allocation0]]
  $region141: #{tpu_custom_call.1} parent=0
    _
  %s30 = ssub.s32 1, %s28
  %s31 = scalar_select 0, %s30, %s28
  $region1: #{tpu_custom_call.1} parent=0
    #allocation2 [shape = 'u8[16384]{0}', space=vmem, size = 0x4000, scoped, tag = 'output window, operand 0']
    #allocation3 [shape = 's32[2]{0}', space=sflag, size = 0x8, scoped, tag = 'scoped memory for tpu_custom_call.1']
    %32 = vsyncpa [#allocation3], 0
    %s33 = scalar_lea.sflag [#allocation3], 1
    %34 = vsyncpa %s33, 0
    loop: start=0, step=1, limit=4
    $region2: #{tpu_custom_call.1} parent=1 // loop_pre_header
      _
    $region3: #{tpu_custom_call.1} parent=1 // loop_header
      %s36 = sphi 0, %s40
      %p37 = scmp.ge.s32.totalorder %s36, 4
      %s46 = sphi 0, %s48
      %s49 = sphi 0, %s46
      %s50 = sphi 0, %s49
      %s66 = sphi 0, %s50
      %s70 = sphi 0, %s70
      %s72 = sphi 0, %s70
      %s73 = sphi 0, %s72
      %s87 = sphi 0, %s73
      %s91 = sphi 0, %s91
      %s93 = sphi 0, %s91
      %s94 = sphi 0, %s93
      %s108 = sphi 0, %s94
      %s112 = sphi 0, %s112
      %s114 = sphi 0, %s112
      %s115 = sphi 0, %s114
      %s129 = sphi 0, %s115
      %s133 = sphi 0, %s133
      %s135 = sphi 0, %s133
      %s136 = sphi 0, %s135
      %s150 = sphi 0, %s136
      %s154 = sphi 0, %s154
      %s156 = sphi 0, %s154
      %s157 = sphi 0, %s156
      %s171 = sphi 0, %s157
      %s175 = sphi 0, %s175
      %s177 = sphi 0, %s175
      %s178 = sphi 0, %s177
      %s192 = sphi 0, %s178
      %s196 = sphi 0, %s196
      %s198 = sphi 0, %s196
      %s199 = sphi 0, %s198
      %s213 = sphi 0, %s199
      %s217 = sphi 0, %s217
      %s219 = sphi 0, %s217
      %s220 = sphi 0, %s219
      %s234 = sphi 0, %s220
      %s238 = sphi 0, %s238
      %s240 = sphi 0, %s238
      %s241 = sphi 0, %s240
      %s255 = sphi 0, %s241
      %s259 = sphi 0, %s259
      %s261 = sphi 0, %s259
      %s262 = sphi 0, %s261
      %s276 = sphi 0, %s262
      %s280 = sphi 0, %s280
      %s282 = sphi 0, %s280
      %s283 = sphi 0, %s282
      %s297 = sphi 0, %s283
      %s301 = sphi 0, %s301
      %s303 = sphi 0, %s301
      %s304 = sphi 0, %s303
      %s318 = sphi 0, %s304
      %s322 = sphi 0, %s322
      %s324 = sphi 0, %s322
      %s325 = sphi 0, %s324
      %s339 = sphi 0, %s325
      %s343 = sphi 0, %s343
      %s345 = sphi 0, %s343
      %s346 = sphi 0, %s345
      %s360 = sphi 0, %s346
      %s364 = sphi 0, %s364
      %s366 = sphi 0, %s364
      %s367 = sphi 0, %s366
      %s381 = sphi 0, %s367
      %s385 = sphi 0, %s385
      %s387 = sphi 0, %s385
      %s388 = sphi 0, %s387
      %s402 = sphi 0, %s388
      %s406 = sphi 0, %s406
      %s408 = sphi 0, %s406
      %s409 = sphi 0, %s408
      %s423 = sphi 0, %s409
      %s427 = sphi 0, %s427
      %s429 = sphi 0, %s427
      %s430 = sphi 0, %s429
      %s444 = sphi 0, %s430
      %s448 = sphi 0, %s448
      %s450 = sphi 0, %s448
      %s451 = sphi 0, %s450
      %s465 = sphi 0, %s451
      %s469 = sphi 0, %s469
      %s471 = sphi 0, %s469
      %s472 = sphi 0, %s471
      %s486 = sphi 0, %s472
      %s490 = sphi 0, %s490
      %s492 = sphi 0, %s490
      %s493 = sphi 0, %s492
      %s507 = sphi 0, %s493
      %s511 = sphi 0, %s511
      %s513 = sphi 0, %s511
      %s514 = sphi 0, %s513
      %s528 = sphi 0, %s514
      %s532 = sphi 0, %s532
      %s534 = sphi 0, %s532
      %s535 = sphi 0, %s534
      %s549 = sphi 0, %s535
      %s553 = sphi 0, %s553
      %s555 = sphi 0, %s553
      %s556 = sphi 0, %s555
      %s570 = sphi 0, %s556
      %s574 = sphi 0, %s574
      %s576 = sphi 0, %s574
      %s577 = sphi 0, %s576
      %s591 = sphi 0, %s577
      %s595 = sphi 0, %s595
      %s597 = sphi 0, %s595
      %s598 = sphi 0, %s597
      %s612 = sphi 0, %s598
      %s618 = sphi 0, %s620
      %s621 = sphi 0, %s618
      %s622 = sphi 0, %s621
      %s638 = sphi 0, %s622
    $region4: #{tpu_custom_call.1} parent=1 // loop_header_branch
      %39 = sbr.rel (%p37) target = $region8
    $region5: #{tpu_custom_call.1} parent=1 // loop_body
      %s41 = ssub.s32 %s36, 1
      %s42 = ssub.s32 %s36, 2
      %s43 = sadd.s32 %s36, 1
      %s44 = ssub.s32 %s36, %s43
      %p45 = scmp.eq.s32.totalorder %s44, 0
      %s47 = sadd.s32 %s46, 1
      %s48 = scalar_select %p45, %s46, %s47
      %p51 = pneg %p45
      %p52 = scmp.eq.s32.totalorder %s36, 1
      %p53 = por %p51, %p52
      %p54 = scmp.ne.s32.totalorder %s46, %s49
      %p55 = scmp.eq.s32.totalorder %s36, 0
      %p56 = por %p54, %p55
      %p57 = scmp.ne.s32.totalorder %s46, %s49
      %p58 = scmp.eq.s32.totalorder %s41, 1
      %p59 = por %p57, %p58
      %p60 = scmp.ne.s32.totalorder %s49, %s50
      %p61 = scmp.eq.s32.totalorder %s41, 0
      %p62 = por %p60, %p61
      %p63 = scmp.ne.s32.totalorder %s49, %s50
      %p64 = scmp.eq.s32.totalorder %s42, 1
      %p65 = por %p63, %p64
      %p67 = scmp.ne.s32.totalorder %s50, %s66
      %p68 = scmp.eq.s32.totalorder %s42, 0
      %p69 = por %p67, %p68
      %s71 = sadd.s32 %s70, 1
      %p74 = scmp.eq.s32.totalorder %s36, 1
      %p75 = scmp.ne.s32.totalorder %s70, %s72
      %p76 = scmp.eq.s32.totalorder %s36, 0
      %p77 = por %p75, %p76
      %p78 = scmp.ne.s32.totalorder %s70, %s72
      %p79 = scmp.eq.s32.totalorder %s41, 1
      %p80 = por %p78, %p79
      %p81 = scmp.ne.s32.totalorder %s72, %s73
      %p82 = scmp.eq.s32.totalorder %s41, 0
      %p83 = por %p81, %p82
      %p84 = scmp.ne.s32.totalorder %s72, %s73
      %p85 = scmp.eq.s32.totalorder %s42, 1
      %p86 = por %p84, %p85
      %p88 = scmp.ne.s32.totalorder %s73, %s87
      %p89 = scmp.eq.s32.totalorder %s42, 0
      %p90 = por %p88, %p89
      %s92 = sadd.s32 %s91, 1
      %p95 = scmp.eq.s32.totalorder %s36, 1
      %p96 = scmp.ne.s32.totalorder %s91, %s93
      %p97 = scmp.eq.s32.totalorder %s36, 0
      %p98 = por %p96, %p97
      %p99 = scmp.ne.s32.totalorder %s91, %s93
      %p100 = scmp.eq.s32.totalorder %s41, 1
      %p101 = por %p99, %p100
      %p102 = scmp.ne.s32.totalorder %s93, %s94
      %p103 = scmp.eq.s32.totalorder %s41, 0
      %p104 = por %p102, %p103
      %p105 = scmp.ne.s32.totalorder %s93, %s94
      %p106 = scmp.eq.s32.totalorder %s42, 1
      %p107 = por %p105, %p106
      %p109 = scmp.ne.s32.totalorder %s94, %s108
      %p110 = scmp.eq.s32.totalorder %s42, 0
      %p111 = por %p109, %p110
      %s113 = sadd.s32 %s112, 1
      %p116 = scmp.eq.s32.totalorder %s36, 1
      %p117 = scmp.ne.s32.totalorder %s112, %s114
      %p118 = scmp.eq.s32.totalorder %s36, 0
      %p119 = por %p117, %p118
      %p120 = scmp.ne.s32.totalorder %s112, %s114
      %p121 = scmp.eq.s32.totalorder %s41, 1
      %p122 = por %p120, %p121
      %p123 = scmp.ne.s32.totalorder %s114, %s115
      %p124 = scmp.eq.s32.totalorder %s41, 0
      %p125 = por %p123, %p124
      %p126 = scmp.ne.s32.totalorder %s114, %s115
      %p127 = scmp.eq.s32.totalorder %s42, 1
      %p128 = por %p126, %p127
      %p130 = scmp.ne.s32.totalorder %s115, %s129
      %p131 = scmp.eq.s32.totalorder %s42, 0
      %p132 = por %p130, %p131
      %s134 = sadd.s32 %s133, 1
      %p137 = scmp.eq.s32.totalorder %s36, 1
      %p138 = scmp.ne.s32.totalorder %s133, %s135
      %p139 = scmp.eq.s32.totalorder %s36, 0
      %p140 = por %p138, %p139
      %p141 = scmp.ne.s32.totalorder %s133, %s135
      %p142 = scmp.eq.s32.totalorder %s41, 1
      %p143 = por %p141, %p142
      %p144 = scmp.ne.s32.totalorder %s135, %s136
      %p145 = scmp.eq.s32.totalorder %s41, 0
      %p146 = por %p144, %p145
      %p147 = scmp.ne.s32.totalorder %s135, %s136
      %p148 = scmp.eq.s32.totalorder %s42, 1
      %p149 = por %p147, %p148
      %p151 = scmp.ne.s32.totalorder %s136, %s150
      %p152 = scmp.eq.s32.totalorder %s42, 0
      %p153 = por %p151, %p152
      %s155 = sadd.s32 %s154, 1
      %p158 = scmp.eq.s32.totalorder %s36, 1
      %p159 = scmp.ne.s32.totalorder %s154, %s156
      %p160 = scmp.eq.s32.totalorder %s36, 0
      %p161 = por %p159, %p160
      %p162 = scmp.ne.s32.totalorder %s154, %s156
      %p163 = scmp.eq.s32.totalorder %s41, 1
      %p164 = por %p162, %p163
      %p165 = scmp.ne.s32.totalorder %s156, %s157
      %p166 = scmp.eq.s32.totalorder %s41, 0
      %p167 = por %p165, %p166
      %p168 = scmp.ne.s32.totalorder %s156, %s157
      %p169 = scmp.eq.s32.totalorder %s42, 1
      %p170 = por %p168, %p169
      %p172 = scmp.ne.s32.totalorder %s157, %s171
      %p173 = scmp.eq.s32.totalorder %s42, 0
      %p174 = por %p172, %p173
      %s176 = sadd.s32 %s175, 1
      %p179 = scmp.eq.s32.totalorder %s36, 1
      %p180 = scmp.ne.s32.totalorder %s175, %s177
      %p181 = scmp.eq.s32.totalorder %s36, 0
      %p182 = por %p180, %p181
      %p183 = scmp.ne.s32.totalorder %s175, %s177
      %p184 = scmp.eq.s32.totalorder %s41, 1
      %p185 = por %p183, %p184
      %p186 = scmp.ne.s32.totalorder %s177, %s178
      %p187 = scmp.eq.s32.totalorder %s41, 0
      %p188 = por %p186, %p187
      %p189 = scmp.ne.s32.totalorder %s177, %s178
      %p190 = scmp.eq.s32.totalorder %s42, 1
      %p191 = por %p189, %p190
      %p193 = scmp.ne.s32.totalorder %s178, %s192
      %p194 = scmp.eq.s32.totalorder %s42, 0
      %p195 = por %p193, %p194
      %s197 = sadd.s32 %s196, 1
      %p200 = scmp.eq.s32.totalorder %s36, 1
      %p201 = scmp.ne.s32.totalorder %s196, %s198
      %p202 = scmp.eq.s32.totalorder %s36, 0
      %p203 = por %p201, %p202
      %p204 = scmp.ne.s32.totalorder %s196, %s198
      %p205 = scmp.eq.s32.totalorder %s41, 1
      %p206 = por %p204, %p205
      %p207 = scmp.ne.s32.totalorder %s198, %s199
      %p208 = scmp.eq.s32.totalorder %s41, 0
      %p209 = por %p207, %p208
      %p210 = scmp.ne.s32.totalorder %s198, %s199
      %p211 = scmp.eq.s32.totalorder %s42, 1
      %p212 = por %p210, %p211
      %p214 = scmp.ne.s32.totalorder %s199, %s213
      %p215 = scmp.eq.s32.totalorder %s42, 0
      %p216 = por %p214, %p215
      %s218 = sadd.s32 %s217, 1
      %p221 = scmp.eq.s32.totalorder %s36, 1
      %p222 = scmp.ne.s32.totalorder %s217, %s219
      %p223 = scmp.eq.s32.totalorder %s36, 0
      %p224 = por %p222, %p223
      %p225 = scmp.ne.s32.totalorder %s217, %s219
      %p226 = scmp.eq.s32.totalorder %s41, 1
      %p227 = por %p225, %p226
      %p228 = scmp.ne.s32.totalorder %s219, %s220
      %p229 = scmp.eq.s32.totalorder %s41, 0
      %p230 = por %p228, %p229
      %p231 = scmp.ne.s32.totalorder %s219, %s220
      %p232 = scmp.eq.s32.totalorder %s42, 1
      %p233 = por %p231, %p232
      %p235 = scmp.ne.s32.totalorder %s220, %s234
      %p236 = scmp.eq.s32.totalorder %s42, 0
      %p237 = por %p235, %p236
      %s239 = sadd.s32 %s238, 1
      %p242 = scmp.eq.s32.totalorder %s36, 1
      %p243 = scmp.ne.s32.totalorder %s238, %s240
      %p244 = scmp.eq.s32.totalorder %s36, 0
      %p245 = por %p243, %p244
      %p246 = scmp.ne.s32.totalorder %s238, %s240
      %p247 = scmp.eq.s32.totalorder %s41, 1
      %p248 = por %p246, %p247
      %p249 = scmp.ne.s32.totalorder %s240, %s241
      %p250 = scmp.eq.s32.totalorder %s41, 0
      %p251 = por %p249, %p250
      %p252 = scmp.ne.s32.totalorder %s240, %s241
      %p253 = scmp.eq.s32.totalorder %s42, 1
      %p254 = por %p252, %p253
      %p256 = scmp.ne.s32.totalorder %s241, %s255
      %p257 = scmp.eq.s32.totalorder %s42, 0
      %p258 = por %p256, %p257
      %s260 = sadd.s32 %s259, 1
      %p263 = scmp.eq.s32.totalorder %s36, 1
      %p264 = scmp.ne.s32.totalorder %s259, %s261
      %p265 = scmp.eq.s32.totalorder %s36, 0
      %p266 = por %p264, %p265
      %p267 = scmp.ne.s32.totalorder %s259, %s261
      %p268 = scmp.eq.s32.totalorder %s41, 1
      %p269 = por %p267, %p268
      %p270 = scmp.ne.s32.totalorder %s261, %s262
      %p271 = scmp.eq.s32.totalorder %s41, 0
      %p272 = por %p270, %p271
      %p273 = scmp.ne.s32.totalorder %s261, %s262
      %p274 = scmp.eq.s32.totalorder %s42, 1
      %p275 = por %p273, %p274
      %p277 = scmp.ne.s32.totalorder %s262, %s276
      %p278 = scmp.eq.s32.totalorder %s42, 0
      %p279 = por %p277, %p278
      %s281 = sadd.s32 %s280, 1
      %p284 = scmp.eq.s32.totalorder %s36, 1
      %p285 = scmp.ne.s32.totalorder %s280, %s282
      %p286 = scmp.eq.s32.totalorder %s36, 0
      %p287 = por %p285, %p286
      %p288 = scmp.ne.s32.totalorder %s280, %s282
      %p289 = scmp.eq.s32.totalorder %s41, 1
      %p290 = por %p288, %p289
      %p291 = scmp.ne.s32.totalorder %s282, %s283
      %p292 = scmp.eq.s32.totalorder %s41, 0
      %p293 = por %p291, %p292
      %p294 = scmp.ne.s32.totalorder %s282, %s283
      %p295 = scmp.eq.s32.totalorder %s42, 1
      %p296 = por %p294, %p295
      %p298 = scmp.ne.s32.totalorder %s283, %s297
      %p299 = scmp.eq.s32.totalorder %s42, 0
      %p300 = por %p298, %p299
      %s302 = sadd.s32 %s301, 1
      %p305 = scmp.eq.s32.totalorder %s36, 1
      %p306 = scmp.ne.s32.totalorder %s301, %s303
      %p307 = scmp.eq.s32.totalorder %s36, 0
      %p308 = por %p306, %p307
      %p309 = scmp.ne.s32.totalorder %s301, %s303
      %p310 = scmp.eq.s32.totalorder %s41, 1
      %p311 = por %p309, %p310
      %p312 = scmp.ne.s32.totalorder %s303, %s304
      %p313 = scmp.eq.s32.totalorder %s41, 0
      %p314 = por %p312, %p313
      %p315 = scmp.ne.s32.totalorder %s303, %s304
      %p316 = scmp.eq.s32.totalorder %s42, 1
      %p317 = por %p315, %p316
      %p319 = scmp.ne.s32.totalorder %s304, %s318
      %p320 = scmp.eq.s32.totalorder %s42, 0
      %p321 = por %p319, %p320
      %s323 = sadd.s32 %s322, 1
      %p326 = scmp.eq.s32.totalorder %s36, 1
      %p327 = scmp.ne.s32.totalorder %s322, %s324
      %p328 = scmp.eq.s32.totalorder %s36, 0
      %p329 = por %p327, %p328
      %p330 = scmp.ne.s32.totalorder %s322, %s324
      %p331 = scmp.eq.s32.totalorder %s41, 1
      %p332 = por %p330, %p331
      %p333 = scmp.ne.s32.totalorder %s324, %s325
      %p334 = scmp.eq.s32.totalorder %s41, 0
      %p335 = por %p333, %p334
      %p336 = scmp.ne.s32.totalorder %s324, %s325
      %p337 = scmp.eq.s32.totalorder %s42, 1
      %p338 = por %p336, %p337
      %p340 = scmp.ne.s32.totalorder %s325, %s339
      %p341 = scmp.eq.s32.totalorder %s42, 0
      %p342 = por %p340, %p341
      %s344 = sadd.s32 %s343, 1
      %p347 = scmp.eq.s32.totalorder %s36, 1
      %p348 = scmp.ne.s32.totalorder %s343, %s345
      %p349 = scmp.eq.s32.totalorder %s36, 0
      %p350 = por %p348, %p349
      %p351 = scmp.ne.s32.totalorder %s343, %s345
      %p352 = scmp.eq.s32.totalorder %s41, 1
      %p353 = por %p351, %p352
      %p354 = scmp.ne.s32.totalorder %s345, %s346
      %p355 = scmp.eq.s32.totalorder %s41, 0
      %p356 = por %p354, %p355
      %p357 = scmp.ne.s32.totalorder %s345, %s346
      %p358 = scmp.eq.s32.totalorder %s42, 1
      %p359 = por %p357, %p358
      %p361 = scmp.ne.s32.totalorder %s346, %s360
      %p362 = scmp.eq.s32.totalorder %s42, 0
      %p363 = por %p361, %p362
      %s365 = sadd.s32 %s364, 1
      %p368 = scmp.eq.s32.totalorder %s36, 1
      %p369 = scmp.ne.s32.totalorder %s364, %s366
      %p370 = scmp.eq.s32.totalorder %s36, 0
      %p371 = por %p369, %p370
      %p372 = scmp.ne.s32.totalorder %s364, %s366
      %p373 = scmp.eq.s32.totalorder %s41, 1
      %p374 = por %p372, %p373
      %p375 = scmp.ne.s32.totalorder %s366, %s367
      %p376 = scmp.eq.s32.totalorder %s41, 0
      %p377 = por %p375, %p376
      %p378 = scmp.ne.s32.totalorder %s366, %s367
      %p379 = scmp.eq.s32.totalorder %s42, 1
      %p380 = por %p378, %p379
      %p382 = scmp.ne.s32.totalorder %s367, %s381
      %p383 = scmp.eq.s32.totalorder %s42, 0
      %p384 = por %p382, %p383
      %s386 = sadd.s32 %s385, 1
      %p389 = scmp.eq.s32.totalorder %s36, 1
      %p390 = scmp.ne.s32.totalorder %s385, %s387
      %p391 = scmp.eq.s32.totalorder %s36, 0
      %p392 = por %p390, %p391
      %p393 = scmp.ne.s32.totalorder %s385, %s387
      %p394 = scmp.eq.s32.totalorder %s41, 1
      %p395 = por %p393, %p394
      %p396 = scmp.ne.s32.totalorder %s387, %s388
      %p397 = scmp.eq.s32.totalorder %s41, 0
      %p398 = por %p396, %p397
      %p399 = scmp.ne.s32.totalorder %s387, %s388
      %p400 = scmp.eq.s32.totalorder %s42, 1
      %p401 = por %p399, %p400
      %p403 = scmp.ne.s32.totalorder %s388, %s402
      %p404 = scmp.eq.s32.totalorder %s42, 0
      %p405 = por %p403, %p404
      %s407 = sadd.s32 %s406, 1
      %p410 = scmp.eq.s32.totalorder %s36, 1
      %p411 = scmp.ne.s32.totalorder %s406, %s408
      %p412 = scmp.eq.s32.totalorder %s36, 0
      %p413 = por %p411, %p412
      %p414 = scmp.ne.s32.totalorder %s406, %s408
      %p415 = scmp.eq.s32.totalorder %s41, 1
      %p416 = por %p414, %p415
      %p417 = scmp.ne.s32.totalorder %s408, %s409
      %p418 = scmp.eq.s32.totalorder %s41, 0
      %p419 = por %p417, %p418
      %p420 = scmp.ne.s32.totalorder %s408, %s409
      %p421 = scmp.eq.s32.totalorder %s42, 1
      %p422 = por %p420, %p421
      %p424 = scmp.ne.s32.totalorder %s409, %s423
      %p425 = scmp.eq.s32.totalorder %s42, 0
      %p426 = por %p424, %p425
      %s428 = sadd.s32 %s427, 1
      %p431 = scmp.eq.s32.totalorder %s36, 1
      %p432 = scmp.ne.s32.totalorder %s427, %s429
      %p433 = scmp.eq.s32.totalorder %s36, 0
      %p434 = por %p432, %p433
      %p435 = scmp.ne.s32.totalorder %s427, %s429
      %p436 = scmp.eq.s32.totalorder %s41, 1
      %p437 = por %p435, %p436
      %p438 = scmp.ne.s32.totalorder %s429, %s430
      %p439 = scmp.eq.s32.totalorder %s41, 0
      %p440 = por %p438, %p439
      %p441 = scmp.ne.s32.totalorder %s429, %s430
      %p442 = scmp.eq.s32.totalorder %s42, 1
      %p443 = por %p441, %p442
      %p445 = scmp.ne.s32.totalorder %s430, %s444
      %p446 = scmp.eq.s32.totalorder %s42, 0
      %p447 = por %p445, %p446
      %s449 = sadd.s32 %s448, 1
      %p452 = scmp.eq.s32.totalorder %s36, 1
      %p453 = scmp.ne.s32.totalorder %s448, %s450
      %p454 = scmp.eq.s32.totalorder %s36, 0
      %p455 = por %p453, %p454
      %p456 = scmp.ne.s32.totalorder %s448, %s450
      %p457 = scmp.eq.s32.totalorder %s41, 1
      %p458 = por %p456, %p457
      %p459 = scmp.ne.s32.totalorder %s450, %s451
      %p460 = scmp.eq.s32.totalorder %s41, 0
      %p461 = por %p459, %p460
      %p462 = scmp.ne.s32.totalorder %s450, %s451
      %p463 = scmp.eq.s32.totalorder %s42, 1
      %p464 = por %p462, %p463
      %p466 = scmp.ne.s32.totalorder %s451, %s465
      %p467 = scmp.eq.s32.totalorder %s42, 0
      %p468 = por %p466, %p467
      %s470 = sadd.s32 %s469, 1
      %p473 = scmp.eq.s32.totalorder %s36, 1
      %p474 = scmp.ne.s32.totalorder %s469, %s471
      %p475 = scmp.eq.s32.totalorder %s36, 0
      %p476 = por %p474, %p475
      %p477 = scmp.ne.s32.totalorder %s469, %s471
      %p478 = scmp.eq.s32.totalorder %s41, 1
      %p479 = por %p477, %p478
      %p480 = scmp.ne.s32.totalorder %s471, %s472
      %p481 = scmp.eq.s32.totalorder %s41, 0
      %p482 = por %p480, %p481
      %p483 = scmp.ne.s32.totalorder %s471, %s472
      %p484 = scmp.eq.s32.totalorder %s42, 1
      %p485 = por %p483, %p484
      %p487 = scmp.ne.s32.totalorder %s472, %s486
      %p488 = scmp.eq.s32.totalorder %s42, 0
      %p489 = por %p487, %p488
      %s491 = sadd.s32 %s490, 1
      %p494 = scmp.eq.s32.totalorder %s36, 1
      %p495 = scmp.ne.s32.totalorder %s490, %s492
      %p496 = scmp.eq.s32.totalorder %s36, 0
      %p497 = por %p495, %p496
      %p498 = scmp.ne.s32.totalorder %s490, %s492
      %p499 = scmp.eq.s32.totalorder %s41, 1
      %p500 = por %p498, %p499
      %p501 = scmp.ne.s32.totalorder %s492, %s493
      %p502 = scmp.eq.s32.totalorder %s41, 0
      %p503 = por %p501, %p502
      %p504 = scmp.ne.s32.totalorder %s492, %s493
      %p505 = scmp.eq.s32.totalorder %s42, 1
      %p506 = por %p504, %p505
      %p508 = scmp.ne.s32.totalorder %s493, %s507
      %p509 = scmp.eq.s32.totalorder %s42, 0
      %p510 = por %p508, %p509
      %s512 = sadd.s32 %s511, 1
      %p515 = scmp.eq.s32.totalorder %s36, 1
      %p516 = scmp.ne.s32.totalorder %s511, %s513
      %p517 = scmp.eq.s32.totalorder %s36, 0
      %p518 = por %p516, %p517
      %p519 = scmp.ne.s32.totalorder %s511, %s513
      %p520 = scmp.eq.s32.totalorder %s41, 1
      %p521 = por %p519, %p520
      %p522 = scmp.ne.s32.totalorder %s513, %s514
      %p523 = scmp.eq.s32.totalorder %s41, 0
      %p524 = por %p522, %p523
      %p525 = scmp.ne.s32.totalorder %s513, %s514
      %p526 = scmp.eq.s32.totalorder %s42, 1
      %p527 = por %p525, %p526
      %p529 = scmp.ne.s32.totalorder %s514, %s528
      %p530 = scmp.eq.s32.totalorder %s42, 0
      %p531 = por %p529, %p530
      %s533 = sadd.s32 %s532, 1
      %p536 = scmp.eq.s32.totalorder %s36, 1
      %p537 = scmp.ne.s32.totalorder %s532, %s534
      %p538 = scmp.eq.s32.totalorder %s36, 0
      %p539 = por %p537, %p538
      %p540 = scmp.ne.s32.totalorder %s532, %s534
      %p541 = scmp.eq.s32.totalorder %s41, 1
      %p542 = por %p540, %p541
      %p543 = scmp.ne.s32.totalorder %s534, %s535
      %p544 = scmp.eq.s32.totalorder %s41, 0
      %p545 = por %p543, %p544
      %p546 = scmp.ne.s32.totalorder %s534, %s535
      %p547 = scmp.eq.s32.totalorder %s42, 1
      %p548 = por %p546, %p547
      %p550 = scmp.ne.s32.totalorder %s535, %s549
      %p551 = scmp.eq.s32.totalorder %s42, 0
      %p552 = por %p550, %p551
      %s554 = sadd.s32 %s553, 1
      %p557 = scmp.eq.s32.totalorder %s36, 1
      %p558 = scmp.ne.s32.totalorder %s553, %s555
      %p559 = scmp.eq.s32.totalorder %s36, 0
      %p560 = por %p558, %p559
      %p561 = scmp.ne.s32.totalorder %s553, %s555
      %p562 = scmp.eq.s32.totalorder %s41, 1
      %p563 = por %p561, %p562
      %p564 = scmp.ne.s32.totalorder %s555, %s556
      %p565 = scmp.eq.s32.totalorder %s41, 0
      %p566 = por %p564, %p565
      %p567 = scmp.ne.s32.totalorder %s555, %s556
      %p568 = scmp.eq.s32.totalorder %s42, 1
      %p569 = por %p567, %p568
      %p571 = scmp.ne.s32.totalorder %s556, %s570
      %p572 = scmp.eq.s32.totalorder %s42, 0
      %p573 = por %p571, %p572
      %s575 = sadd.s32 %s574, 1
      %p578 = scmp.eq.s32.totalorder %s36, 1
      %p579 = scmp.ne.s32.totalorder %s574, %s576
      %p580 = scmp.eq.s32.totalorder %s36, 0
      %p581 = por %p579, %p580
      %p582 = scmp.ne.s32.totalorder %s574, %s576
      %p583 = scmp.eq.s32.totalorder %s41, 1
      %p584 = por %p582, %p583
      %p585 = scmp.ne.s32.totalorder %s576, %s577
      %p586 = scmp.eq.s32.totalorder %s41, 0
      %p587 = por %p585, %p586
      %p588 = scmp.ne.s32.totalorder %s576, %s577
      %p589 = scmp.eq.s32.totalorder %s42, 1
      %p590 = por %p588, %p589
      %p592 = scmp.ne.s32.totalorder %s577, %s591
      %p593 = scmp.eq.s32.totalorder %s42, 0
      %p594 = por %p592, %p593
      %s596 = sadd.s32 %s595, 1
      %p599 = scmp.eq.s32.totalorder %s36, 1
      %p600 = scmp.ne.s32.totalorder %s595, %s597
      %p601 = scmp.eq.s32.totalorder %s36, 0
      %p602 = por %p600, %p601
      %p603 = scmp.ne.s32.totalorder %s595, %s597
      %p604 = scmp.eq.s32.totalorder %s41, 1
      %p605 = por %p603, %p604
      %p606 = scmp.ne.s32.totalorder %s597, %s598
      %p607 = scmp.eq.s32.totalorder %s41, 0
      %p608 = por %p606, %p607
      %p609 = scmp.ne.s32.totalorder %s597, %s598
      %p610 = scmp.eq.s32.totalorder %s42, 1
      %p611 = por %p609, %p610
      %p613 = scmp.ne.s32.totalorder %s598, %s612
      %p614 = scmp.eq.s32.totalorder %s42, 0
      %p615 = por %p613, %p614
      %s616 = ssub.s32 %s36, %s43
      %p617 = scmp.eq.s32.totalorder %s616, 0
      %s619 = sadd.s32 %s618, 1
      %s620 = scalar_select %p617, %s618, %s619
      %p623 = pneg %p617
      %p624 = scmp.eq.s32.totalorder %s36, 1
      %p625 = por %p623, %p624
      %p626 = scmp.ne.s32.totalorder %s618, %s621
      %p627 = scmp.eq.s32.totalorder %s36, 0
      %p628 = por %p626, %p627
      %p629 = scmp.ne.s32.totalorder %s618, %s621
      %p630 = scmp.eq.s32.totalorder %s41, 1
      %p631 = por %p629, %p630
      %p632 = scmp.ne.s32.totalorder %s621, %s622
      %p633 = scmp.eq.s32.totalorder %s41, 0
      %p634 = por %p632, %p633
      %p635 = scmp.ne.s32.totalorder %s621, %s622
      %p636 = scmp.eq.s32.totalorder %s42, 1
      %p637 = por %p635, %p636
      %p639 = scmp.ne.s32.totalorder %s622, %s638
      %p640 = scmp.eq.s32.totalorder %s42, 0
      %p641 = por %p639, %p640
      %p642 = scmp.le.s32.totalorder 1, %s36
      %p643 = scmp.lt.s32.totalorder %s36, 3
      %p644 = pnand %p642, %p643
      %p645 = pneg %p644
      // Predicated region
      $region9: #{tpu_custom_call.1} parent=5 // pred_check
        _
      $region10: #{tpu_custom_call.1} parent=5 // pred_check_branch
        %647 = sbr.rel (%p644) target = $region12
      $region11: #{tpu_custom_call.1} parent=5 // pred_region
        %s648 = ssub.s32 %s36, 1
        // Predicated region
        $region13: #{tpu_custom_call.1} parent=11 // pred_check
          %p649 = pneg %p83
        $region14: #{tpu_custom_call.1} parent=11 // pred_check_branch
          %651 = sbr.rel (%p649) target = $region16
        $region15: #{tpu_custom_call.1} parent=11 // pred_region
          _
        $region16: #{tpu_custom_call.1} parent=11 // pred_fallthru
          _
        // Predicated region
        $region17: #{tpu_custom_call.1} parent=11 // pred_check
          %p652 = pneg %p104
        $region18: #{tpu_custom_call.1} parent=11 // pred_check_branch
          %654 = sbr.rel (%p652) target = $region20
        $region19: #{tpu_custom_call.1} parent=11 // pred_region
          _
        $region20: #{tpu_custom_call.1} parent=11 // pred_fallthru
          _
        // Predicated region
        $region21: #{tpu_custom_call.1} parent=11 // pred_check
          %p655 = pneg %p125
        $region22: #{tpu_custom_call.1} parent=11 // pred_check_branch
          %657 = sbr.rel (%p655) target = $region24
        $region23: #{tpu_custom_call.1} parent=11 // pred_region
          _
        $region24: #{tpu_custom_call.1} parent=11 // pred_fallthru
          _
        // Predicated region
        $region25: #{tpu_custom_call.1} parent=11 // pred_check
          %p658 = pneg %p146
        $region26: #{tpu_custom_call.1} parent=11 // pred_check_branch
          %660 = sbr.rel (%p658) target = $region28
        $region27: #{tpu_custom_call.1} parent=11 // pred_region
          _
        $region28: #{tpu_custom_call.1} parent=11 // pred_fallthru
          _
        // Predicated region
        $region29: #{tpu_custom_call.1} parent=11 // pred_check
          %p661 = pneg %p167
        $region30: #{tpu_custom_call.1} parent=11 // pred_check_branch
          %663 = sbr.rel (%p661) target = $region32
        $region31: #{tpu_custom_call.1} parent=11 // pred_region
          _
        $region32: #{tpu_custom_call.1} parent=11 // pred_fallthru
          _
        // Predicated region
        $region33: #{tpu_custom_call.1} parent=11 // pred_check
          %p664 = pneg %p188
        $region34: #{tpu_custom_call.1} parent=11 // pred_check_branch
          %666 = sbr.rel (%p664) target = $region36
        $region35: #{tpu_custom_call.1} parent=11 // pred_region
          _
        $region36: #{tpu_custom_call.1} parent=11 // pred_fallthru
          _
        // Predicated region
        $region37: #{tpu_custom_call.1} parent=11 // pred_check
          %p667 = pneg %p209
        $region38: #{tpu_custom_call.1} parent=11 // pred_check_branch
          %669 = sbr.rel (%p667) target = $region40
        $region39: #{tpu_custom_call.1} parent=11 // pred_region
          _
        $region40: #{tpu_custom_call.1} parent=11 // pred_fallthru
          _
        // Predicated region
        $region41: #{tpu_custom_call.1} parent=11 // pred_check
          %p670 = pneg %p230
        $region42: #{tpu_custom_call.1} parent=11 // pred_check_branch
          %672 = sbr.rel (%p670) target = $region44
        $region43: #{tpu_custom_call.1} parent=11 // pred_region
          _
        $region44: #{tpu_custom_call.1} parent=11 // pred_fallthru
          _
        // Predicated region
        $region45: #{tpu_custom_call.1} parent=11 // pred_check
          %p673 = pneg %p251
        $region46: #{tpu_custom_call.1} parent=11 // pred_check_branch
          %675 = sbr.rel (%p673) target = $region48
        $region47: #{tpu_custom_call.1} parent=11 // pred_region
          _
        $region48: #{tpu_custom_call.1} parent=11 // pred_fallthru
          _
        // Predicated region
        $region49: #{tpu_custom_call.1} parent=11 // pred_check
          %p676 = pneg %p272
        $region50: #{tpu_custom_call.1} parent=11 // pred_check_branch
          %678 = sbr.rel (%p676) target = $region52
        $region51: #{tpu_custom_call.1} parent=11 // pred_region
          _
        $region52: #{tpu_custom_call.1} parent=11 // pred_fallthru
          _
        // Predicated region
        $region53: #{tpu_custom_call.1} parent=11 // pred_check
          %p679 = pneg %p293
        $region54: #{tpu_custom_call.1} parent=11 // pred_check_branch
          %681 = sbr.rel (%p679) target = $region56
        $region55: #{tpu_custom_call.1} parent=11 // pred_region
          _
        $region56: #{tpu_custom_call.1} parent=11 // pred_fallthru
          _
        // Predicated region
        $region57: #{tpu_custom_call.1} parent=11 // pred_check
          %p682 = pneg %p314
        $region58: #{tpu_custom_call.1} parent=11 // pred_check_branch
          %684 = sbr.rel (%p682) target = $region60
        $region59: #{tpu_custom_call.1} parent=11 // pred_region
          _
        $region60: #{tpu_custom_call.1} parent=11 // pred_fallthru
          _
        // Predicated region
        $region61: #{tpu_custom_call.1} parent=11 // pred_check
          %p685 = pneg %p335
        $region62: #{tpu_custom_call.1} parent=11 // pred_check_branch
          %687 = sbr.rel (%p685) target = $region64
        $region63: #{tpu_custom_call.1} parent=11 // pred_region
          _
        $region64: #{tpu_custom_call.1} parent=11 // pred_fallthru
          _
        // Predicated region
        $region65: #{tpu_custom_call.1} parent=11 // pred_check
          %p688 = pneg %p356
        $region66: #{tpu_custom_call.1} parent=11 // pred_check_branch
          %690 = sbr.rel (%p688) target = $region68
        $region67: #{tpu_custom_call.1} parent=11 // pred_region
          _
        $region68: #{tpu_custom_call.1} parent=11 // pred_fallthru
          _
        // Predicated region
        $region69: #{tpu_custom_call.1} parent=11 // pred_check
          %p691 = pneg %p377
        $region70: #{tpu_custom_call.1} parent=11 // pred_check_branch
          %693 = sbr.rel (%p691) target = $region72
        $region71: #{tpu_custom_call.1} parent=11 // pred_region
          _
        $region72: #{tpu_custom_call.1} parent=11 // pred_fallthru
          _
        // Predicated region
        $region73: #{tpu_custom_call.1} parent=11 // pred_check
          %p694 = pneg %p398
        $region74: #{tpu_custom_call.1} parent=11 // pred_check_branch
          %696 = sbr.rel (%p694) target = $region76
        $region75: #{tpu_custom_call.1} parent=11 // pred_region
          _
        $region76: #{tpu_custom_call.1} parent=11 // pred_fallthru
          _
        // Predicated region
        $region77: #{tpu_custom_call.1} parent=11 // pred_check
          %p697 = pneg %p419
        $region78: #{tpu_custom_call.1} parent=11 // pred_check_branch
          %699 = sbr.rel (%p697) target = $region80
        $region79: #{tpu_custom_call.1} parent=11 // pred_region
          _
        $region80: #{tpu_custom_call.1} parent=11 // pred_fallthru
          _
        // Predicated region
        $region81: #{tpu_custom_call.1} parent=11 // pred_check
          %p700 = pneg %p440
        $region82: #{tpu_custom_call.1} parent=11 // pred_check_branch
          %702 = sbr.rel (%p700) target = $region84
        $region83: #{tpu_custom_call.1} parent=11 // pred_region
          _
        $region84: #{tpu_custom_call.1} parent=11 // pred_fallthru
          _
        // Predicated region
        $region85: #{tpu_custom_call.1} parent=11 // pred_check
          %p703 = pneg %p461
        $region86: #{tpu_custom_call.1} parent=11 // pred_check_branch
          %705 = sbr.rel (%p703) target = $region88
        $region87: #{tpu_custom_call.1} parent=11 // pred_region
          _
        $region88: #{tpu_custom_call.1} parent=11 // pred_fallthru
          _
        // Predicated region
        $region89: #{tpu_custom_call.1} parent=11 // pred_check
          %p706 = pneg %p482
        $region90: #{tpu_custom_call.1} parent=11 // pred_check_branch
          %708 = sbr.rel (%p706) target = $region92
        $region91: #{tpu_custom_call.1} parent=11 // pred_region
          _
        $region92: #{tpu_custom_call.1} parent=11 // pred_fallthru
          _
        // Predicated region
        $region93: #{tpu_custom_call.1} parent=11 // pred_check
          %p709 = pneg %p503
        $region94: #{tpu_custom_call.1} parent=11 // pred_check_branch
          %711 = sbr.rel (%p709) target = $region96
        $region95: #{tpu_custom_call.1} parent=11 // pred_region
          _
        $region96: #{tpu_custom_call.1} parent=11 // pred_fallthru
          _
        // Predicated region
        $region97: #{tpu_custom_call.1} parent=11 // pred_check
          %p712 = pneg %p524
        $region98: #{tpu_custom_call.1} parent=11 // pred_check_branch
          %714 = sbr.rel (%p712) target = $region100
        $region99: #{tpu_custom_call.1} parent=11 // pred_region
          _
        $region100: #{tpu_custom_call.1} parent=11 // pred_fallthru
          _
        // Predicated region
        $region101: #{tpu_custom_call.1} parent=11 // pred_check
          %p715 = pneg %p545
        $region102: #{tpu_custom_call.1} parent=11 // pred_check_branch
          %717 = sbr.rel (%p715) target = $region104
        $region103: #{tpu_custom_call.1} parent=11 // pred_region
          _
        $region104: #{tpu_custom_call.1} parent=11 // pred_fallthru
          _
        // Predicated region
        $region105: #{tpu_custom_call.1} parent=11 // pred_check
          %p718 = pneg %p566
        $region106: #{tpu_custom_call.1} parent=11 // pred_check_branch
          %720 = sbr.rel (%p718) target = $region108
        $region107: #{tpu_custom_call.1} parent=11 // pred_region
          _
        $region108: #{tpu_custom_call.1} parent=11 // pred_fallthru
          _
        // Predicated region
        $region109: #{tpu_custom_call.1} parent=11 // pred_check
          %p721 = pneg %p587
        $region110: #{tpu_custom_call.1} parent=11 // pred_check_branch
          %723 = sbr.rel (%p721) target = $region112
        $region111: #{tpu_custom_call.1} parent=11 // pred_region
          _
        $region112: #{tpu_custom_call.1} parent=11 // pred_fallthru
          _
        // Predicated region
        $region113: #{tpu_custom_call.1} parent=11 // pred_check
          %p724 = pneg %p608
        $region114: #{tpu_custom_call.1} parent=11 // pred_check_branch
          %726 = sbr.rel (%p724) target = $region116
        $region115: #{tpu_custom_call.1} parent=11 // pred_region
          _
        $region116: #{tpu_custom_call.1} parent=11 // pred_fallthru
          _
      $region12: #{tpu_custom_call.1} parent=5 // pred_fallthru
        _
      %p727 = scmp.lt.s32.totalorder %s36, 2
      // Predicated region
      $region117: #{tpu_custom_call.1} parent=5 // pred_check
        %p728 = pneg %p727
      $region118: #{tpu_custom_call.1} parent=5 // pred_check_branch
        %730 = sbr.rel (%p728) target = $region120
      $region119: #{tpu_custom_call.1} parent=5 // pred_region
        // Predicated region
        $region121: #{tpu_custom_call.1} parent=119 // pred_check
          %p731 = pneg %p56
        $region122: #{tpu_custom_call.1} parent=119 // pred_check_branch
          %733 = sbr.rel (%p731) target = $region124
        $region123: #{tpu_custom_call.1} parent=119 // pred_region
          %p734 = scmp.lt.s32.totalorder %s36, 1
          %s735 = scalar_select %p734, %s36, 1
          %s736 = smul.addr %s735, 2
          %s737 = smul.addr %s736, 8
          %s738 = scalar_lea.vmem %s0, %s737
        $region124: #{tpu_custom_call.1} parent=119 // pred_fallthru
          _
      $region120: #{tpu_custom_call.1} parent=5 // pred_fallthru
        _
      %p739 = scmp.le.s32.totalorder 1, %s36
      %p740 = scmp.lt.s32.totalorder %s36, 3
      %p741 = pnand %p739, %p740
      %p742 = pneg %p741
      // Predicated region
      $region125: #{tpu_custom_call.1} parent=5 // pred_check
        _
      $region126: #{tpu_custom_call.1} parent=5 // pred_check_branch
        %744 = sbr.rel (%p741) target = $region128
      $region127: #{tpu_custom_call.1} parent=5 // pred_region
        %s745 = ssub.s32 %s36, 1
        %p746 = scmp.lt.s32.totalorder %s41, 1
        %s747 = scalar_select %p746, %s41, 1
        %s748 = smul.addr %s747, 2
        %s749 = smul.addr %s748, 8
        %s750 = scalar_lea.vmem %s0, %s749
        %p751 = pneg %p62
        %p752 = pneg %p59
        %p753 = pneg %p83
        %p754 = pneg %p80
        %p755 = pneg %p104
        %p756 = pneg %p101
        %p757 = pneg %p125
        %p758 = pneg %p122
        %p759 = pneg %p146
        %p760 = pneg %p143
        %p761 = pneg %p167
        %p762 = pneg %p164
        %p763 = pneg %p188
        %p764 = pneg %p185
        %p765 = pneg %p209
        %p766 = pneg %p206
        %p767 = pneg %p230
        %p768 = pneg %p227
        %p769 = pneg %p251
        %p770 = pneg %p248
        %p771 = pneg %p272
        %p772 = pneg %p269
        %p773 = pneg %p293
        %p774 = pneg %p290
        %p775 = pneg %p314
        %p776 = pneg %p311
        %p777 = pneg %p335
        %p778 = pneg %p332
        %p779 = pneg %p356
        %p780 = pneg %p353
        %p781 = pneg %p377
        %p782 = pneg %p374
        %p783 = pneg %p398
        %p784 = pneg %p395
        %p785 = pneg %p419
        %p786 = pneg %p416
        %p787 = pneg %p440
        %p788 = pneg %p437
        %p789 = pneg %p461
        %p790 = pneg %p458
        %p791 = pneg %p482
        %p792 = pneg %p479
        %p793 = pneg %p503
        %p794 = pneg %p500
        %p795 = pneg %p524
        %p796 = pneg %p521
        %p797 = pneg %p545
        %p798 = pneg %p542
        %p799 = pneg %p566
        %p800 = pneg %p563
        %p801 = pneg %p587
        %p802 = pneg %p584
        %p803 = pneg %p608
        %p804 = pneg %p605
        %p805 = pneg %p634
        %p806 = pneg %p631
        %s807 = sand.u32 %s621, 1
        %s808 = scalar_lea.sflag [#allocation3], %s807
        %s809 = sand.u32 %s621, 1
        %s810 = smul.addr %s809, 16
        %s811 = scalar_lea.vmem [#allocation2], %s810
        %p812 = scmp.lt.s32.totalorder %s41, 1
        %s813 = scalar_select %p812, %s41, 1
        %s814 = smul.addr %s813, 2
        %s815 = smul.addr %s814, 8
        %s816 = scalar_lea.vmem %s0, %s815
        %v818 = vld [vmem:[%s816] sm:$0xff]
        %v819 = vld [vmem:[%s816 + $0x8] sm:$0xff]
        %v820 = vpack.c.bf16 %v819, %v818
        %v821 = vld [vmem:[%s1] sm:$0xf]
        %v822 = vld [vmem:[%s1 + $0x4] sm:$0xf]
        %v823 = vld [vmem:[%s1 + $0x8] sm:$0xf]
        %v824 = vld [vmem:[%s1 + $0xc] sm:$0xf]
        %v825 = vld [vmem:[%s1 + $0x10] sm:$0xf]
        %v826 = vld [vmem:[%s1 + $0x14] sm:$0xf]
        %v827 = vld [vmem:[%s1 + $0x18] sm:$0xf]
        %v828 = vld [vmem:[%s1 + $0x1c] sm:$0xf]
        %v837 = vunpack.c.l.b16 %v821
        %v838 = vunpack.c.l.b16 %v822
        %v839 = vunpack.c.l.b16 %v823
        %v840 = vunpack.c.l.b16 %v824
        %v841 = vunpack.c.l.b16 %v825
        %v842 = vunpack.c.l.b16 %v826
        %v843 = vunpack.c.l.b16 %v827
        %v844 = vunpack.c.l.b16 %v828
        %v845 = vpack.c.b16 %v838, %v837
        %v846 = vpack.c.b16 %v840, %v839
        %v847 = vpack.c.b16 %v842, %v841
        %v848 = vpack.c.b16 %v844, %v843
        %vm853 = vcmask 523264
        %v855 = vsel %vm853, %v820, 0
        %857 = vmatpush.bf16.msra.mxu0 0
        %858 = vmatpush.bf16.msra.mxu0 0
        %859 = vmatpush.bf16.msra.mxu0 0
        %860 = vmatpush.bf16.msra.mxu0 0
        %861 = vmatpush.bf16.msra.mxu0 %v848
        %862 = vmatpush.bf16.msra.mxu0 %v847
        %863 = vmatpush.bf16.msra.mxu0 %v846
        %864 = vmatpush.bf16.msra.mxu0 %v845
        %865 = vmatmul.bf16.gmra.mxu0 %v855
        %v866 = vpop.f32.mrf.mxu0
        %v867 = vadd.f32 0.0, %v866
        %v868 = vpop.f32.mrf.mxu0
        %v869 = vadd.f32 0.0, %v868
        %870 = vdwg.mxu0
        %v871 = vld [vmem:[%s3] sm:$0x1]
        %v873 = vperm.slane %v871, 0
        %v875 = vadd.f32 %v867, %v873
        %v876 = vadd.f32 %v869, %v873
        %vm879 = vcmask 1040384
        %v880 = vrot.slane %v818, 7
        %v881 = vrot.slane %v819, 7
        %v882 = vsel %vm879, %v880, %v881
        %v885 = vsel %vm879, 0.0, %v880
        %v886 = vpack.c.bf16 %v882, %v885
        %v887 = vld [vmem:[%s2] sm:$0xf]
        %v888 = vld [vmem:[%s2 + $0x4] sm:$0xf]
        %v889 = vld [vmem:[%s2 + $0x8] sm:$0xf]
        %v890 = vld [vmem:[%s2 + $0xc] sm:$0xf]
        %v891 = vld [vmem:[%s2 + $0x10] sm:$0xf]
        %v892 = vld [vmem:[%s2 + $0x14] sm:$0xf]
        %v893 = vld [vmem:[%s2 + $0x18] sm:$0xf]
        %v894 = vld [vmem:[%s2 + $0x1c] sm:$0xf]
        %v903 = vunpack.c.l.b16 %v887
        %v904 = vunpack.c.l.b16 %v888
        %v905 = vunpack.c.l.b16 %v889
        %v906 = vunpack.c.l.b16 %v890
        %v907 = vunpack.c.l.b16 %v891
        %v908 = vunpack.c.l.b16 %v892
        %v909 = vunpack.c.l.b16 %v893
        %v910 = vunpack.c.l.b16 %v894
        %v911 = vpack.c.b16 %v904, %v903
        %v912 = vpack.c.b16 %v906, %v905
        %v913 = vpack.c.b16 %v908, %v907
        %v914 = vpack.c.b16 %v910, %v909
        %v920 = vsel %vm853, %v886, 0
        %922 = vmatpush.bf16.msra.mxu0 0
        %923 = vmatpush.bf16.msra.mxu0 0
        %924 = vmatpush.bf16.msra.mxu0 0
        %925 = vmatpush.bf16.msra.mxu0 0
        %926 = vmatpush.bf16.msra.mxu0 %v914
        %927 = vmatpush.bf16.msra.mxu0 %v913
        %928 = vmatpush.bf16.msra.mxu0 %v912
        %929 = vmatpush.bf16.msra.mxu0 %v911
        %930 = vmatmul.bf16.gmra.mxu0 %v920
        %v931 = vpop.f32.mrf.mxu0
        %v932 = vadd.f32 0.0, %v931
        %v933 = vpop.f32.mrf.mxu0
        %v934 = vadd.f32 0.0, %v933
        %935 = vdwg.mxu0
        %v936 = vadd.f32 %v875, %v932
        %v937 = vadd.f32 %v876, %v934
        %vm938 = vcmask 1046528
        %v939 = vrot.slane %v818, 1
        %v940 = vrot.slane %v819, 1
        %v941 = vsel %vm938, %v939, %v940
        %v944 = vsel %vm938, %v940, 0.0
        %v945 = vpack.c.bf16 %v944, %v941
        %s946 = scalar_lea.vmem %s2, 32
        %v947 = vld [vmem:[%s946] sm:$0xf]
        %v948 = vld [vmem:[%s946 + $0x4] sm:$0xf]
        %v949 = vld [vmem:[%s946 + $0x8] sm:$0xf]
        %v950 = vld [vmem:[%s946 + $0xc] sm:$0xf]
        %v951 = vld [vmem:[%s946 + $0x10] sm:$0xf]
        %v952 = vld [vmem:[%s946 + $0x14] sm:$0xf]
        %v953 = vld [vmem:[%s946 + $0x18] sm:$0xf]
        %v954 = vld [vmem:[%s946 + $0x1c] sm:$0xf]
        %v963 = vunpack.c.l.b16 %v947
        %v964 = vunpack.c.l.b16 %v948
        %v965 = vunpack.c.l.b16 %v949
        %v966 = vunpack.c.l.b16 %v950
        %v967 = vunpack.c.l.b16 %v951
        %v968 = vunpack.c.l.b16 %v952
        %v969 = vunpack.c.l.b16 %v953
        %v970 = vunpack.c.l.b16 %v954
        %v971 = vpack.c.b16 %v964, %v963
        %v972 = vpack.c.b16 %v966, %v965
        %v973 = vpack.c.b16 %v968, %v967
        %v974 = vpack.c.b16 %v970, %v969
        %v980 = vsel %vm853, %v945, 0
        %982 = vmatpush.bf16.msra.mxu0 0
        %983 = vmatpush.bf16.msra.mxu0 0
        %984 = vmatpush.bf16.msra.mxu0 0
        %985 = vmatpush.bf16.msra.mxu0 0
        %986 = vmatpush.bf16.msra.mxu0 %v974
        %987 = vmatpush.bf16.msra.mxu0 %v973
        %988 = vmatpush.bf16.msra.mxu0 %v972
        %989 = vmatpush.bf16.msra.mxu0 %v971
        %990 = vmatmul.bf16.gmra.mxu0 %v980
        %v991 = vpop.f32.mrf.mxu0
        %v992 = vadd.f32 0.0, %v991
        %v993 = vpop.f32.mrf.mxu0
        %v994 = vadd.f32 0.0, %v993
        %995 = vdwg.mxu0
        %v996 = vadd.f32 %v936, %v992
        %v997 = vadd.f32 %v937, %v994
        %v998 = vmax.f32 %v996, 0.0
        %v999 = vmax.f32 %v997, 0.0
        %v1000 = vld [vmem:[%s4] sm:$0x1]
        %v1002 = vperm.slane %v1000, 0
        %v1004 = vmul.f32 %v998, %v1002
        %v1005 = vmul.f32 %v999, %v1002
        %v1006 = vld [vmem:[%s5] sm:$0x1]
        %v1008 = vperm.slane %v1006, 0
        %v1010 = vadd.f32 %v1004, %v1008
        %v1011 = vadd.f32 %v1005, %v1008
        %v1012 = vld [vmem:[%s7] sm:$0x1]
        %v1014 = vperm.slane %v1012, 0
        %1015 = vrot.lane.b32.xlu0 %v1014, 16
        %v1016 = vpop.permute.xlu0 %1015
        %v1018 = vadd.f32 %v867, %v1016
        %v1019 = vadd.f32 %v869, %v1016
        %vm1020 = vcmask 1041408
        %v1021 = vrot.slane %v818, 6
        %v1022 = vrot.slane %v819, 6
        %v1023 = vsel %vm1020, %v1021, %v1022
        %v1026 = vsel %vm1020, 0.0, %v1021
        %v1027 = vpack.c.bf16 %v1023, %v1026
        %v1028 = vld [vmem:[%s6] sm:$0xf]
        %v1029 = vld [vmem:[%s6 + $0x4] sm:$0xf]
        %v1030 = vld [vmem:[%s6 + $0x8] sm:$0xf]
        %v1031 = vld [vmem:[%s6 + $0xc] sm:$0xf]
        %v1032 = vld [vmem:[%s6 + $0x10] sm:$0xf]
        %v1033 = vld [vmem:[%s6 + $0x14] sm:$0xf]
        %v1034 = vld [vmem:[%s6 + $0x18] sm:$0xf]
        %v1035 = vld [vmem:[%s6 + $0x1c] sm:$0xf]
        %v1044 = vunpack.c.l.b16 %v1028
        %v1045 = vunpack.c.l.b16 %v1029
        %v1046 = vunpack.c.l.b16 %v1030
        %v1047 = vunpack.c.l.b16 %v1031
        %v1048 = vunpack.c.l.b16 %v1032
        %v1049 = vunpack.c.l.b16 %v1033
        %v1050 = vunpack.c.l.b16 %v1034
        %v1051 = vunpack.c.l.b16 %v1035
        %v1052 = vpack.c.b16 %v1045, %v1044
        %v1053 = vpack.c.b16 %v1047, %v1046
        %v1054 = vpack.c.b16 %v1049, %v1048
        %v1055 = vpack.c.b16 %v1051, %v1050
        %v1061 = vsel %vm853, %v1027, 0
        %1063 = vmatpush.bf16.msra.mxu0 0
        %1064 = vmatpush.bf16.msra.mxu0 0
        %1065 = vmatpush.bf16.msra.mxu0 0
        %1066 = vmatpush.bf16.msra.mxu0 0
        %1067 = vmatpush.bf16.msra.mxu0 %v1055
        %1068 = vmatpush.bf16.msra.mxu0 %v1054
        %1069 = vmatpush.bf16.msra.mxu0 %v1053
        %1070 = vmatpush.bf16.msra.mxu0 %v1052
        %1071 = vmatmul.bf16.gmra.mxu0 %v1061
        %v1072 = vpop.f32.mrf.mxu0
        %v1073 = vadd.f32 0.0, %v1072
        %v1074 = vpop.f32.mrf.mxu0
        %v1075 = vadd.f32 0.0, %v1074
        %1076 = vdwg.mxu0
        %1079 = vrot.lane.b32.xlu0 %v1073, 16
        %v1080 = vpop.permute.xlu0 %1079
        %1081 = vrot.lane.b32.xlu0 %v1075, 16
        %v1082 = vpop.permute.xlu0 %1081
        %v1085 = vadd.f32 %v1018, %v1080
        %v1086 = vadd.f32 %v1019, %v1082
        %vm1087 = vcmask 1045504
        %v1088 = vrot.slane %v818, 2
        %v1089 = vrot.slane %v819, 2
        %v1090 = vsel %vm1087, %v1088, %v1089
        %v1093 = vsel %vm1087, %v1089, 0.0
        %v1094 = vpack.c.bf16 %v1093, %v1090
        %s1095 = scalar_lea.vmem %s6, 32
        %v1096 = vld [vmem:[%s1095] sm:$0xf]
        %v1097 = vld [vmem:[%s1095 + $0x4] sm:$0xf]
        %v1098 = vld [vmem:[%s1095 + $0x8] sm:$0xf]
        %v1099 = vld [vmem:[%s1095 + $0xc] sm:$0xf]
        %v1100 = vld [vmem:[%s1095 + $0x10] sm:$0xf]
        %v1101 = vld [vmem:[%s1095 + $0x14] sm:$0xf]
        %v1102 = vld [vmem:[%s1095 + $0x18] sm:$0xf]
        %v1103 = vld [vmem:[%s1095 + $0x1c] sm:$0xf]
        %v1112 = vunpack.c.l.b16 %v1096
        %v1113 = vunpack.c.l.b16 %v1097
        %v1114 = vunpack.c.l.b16 %v1098
        %v1115 = vunpack.c.l.b16 %v1099
        %v1116 = vunpack.c.l.b16 %v1100
        %v1117 = vunpack.c.l.b16 %v1101
        %v1118 = vunpack.c.l.b16 %v1102
        %v1119 = vunpack.c.l.b16 %v1103
        %v1120 = vpack.c.b16 %v1113, %v1112
        %v1121 = vpack.c.b16 %v1115, %v1114
        %v1122 = vpack.c.b16 %v1117, %v1116
        %v1123 = vpack.c.b16 %v1119, %v1118
        %v1129 = vsel %vm853, %v1094, 0
        %1131 = vmatpush.bf16.msra.mxu0 0
        %1132 = vmatpush.bf16.msra.mxu0 0
        %1133 = vmatpush.bf16.msra.mxu0 0
        %1134 = vmatpush.bf16.msra.mxu0 0
        %1135 = vmatpush.bf16.msra.mxu0 %v1123
        %1136 = vmatpush.bf16.msra.mxu0 %v1122
        %1137 = vmatpush.bf16.msra.mxu0 %v1121
        %1138 = vmatpush.bf16.msra.mxu0 %v1120
        %1139 = vmatmul.bf16.gmra.mxu0 %v1129
        %v1140 = vpop.f32.mrf.mxu0
        %v1141 = vadd.f32 0.0, %v1140
        %v1142 = vpop.f32.mrf.mxu0
        %v1143 = vadd.f32 0.0, %v1142
        %1144 = vdwg.mxu0
        %1147 = vrot.lane.b32.xlu0 %v1141, 16
        %v1148 = vpop.permute.xlu0 %1147
        %1149 = vrot.lane.b32.xlu0 %v1143, 16
        %v1150 = vpop.permute.xlu0 %1149
        %v1153 = vadd.f32 %v1085, %v1148
        %v1154 = vadd.f32 %v1086, %v1150
        %v1155 = vmax.f32 %v1153, 0.0
        %v1156 = vmax.f32 %v1154, 0.0
        %v1157 = vld [vmem:[%s8] sm:$0x1]
        %v1159 = vperm.slane %v1157, 0
        %1160 = vrot.lane.b32.xlu0 %v1159, 16
        %v1161 = vpop.permute.xlu0 %1160
        %v1163 = vmul.f32 %v1155, %v1161
        %v1164 = vmul.f32 %v1156, %v1161
        %v1165 = vld [vmem:[%s9] sm:$0x1]
        %v1167 = vperm.slane %v1165, 0
        %1168 = vrot.lane.b32.xlu0 %v1167, 16
        %v1169 = vpop.permute.xlu0 %1168
        %v1171 = vadd.f32 %v1163, %v1169
        %v1172 = vadd.f32 %v1164, %v1169
        %v1173 = vld [vmem:[%s11] sm:$0x1]
        %v1175 = vperm.slane %v1173, 0
        %1176 = vrot.lane.b32.xlu0 %v1175, 32
        %v1177 = vpop.permute.xlu0 %1176
        %v1179 = vadd.f32 %v867, %v1177
        %v1180 = vadd.f32 %v869, %v1177
        %vm1181 = vcmask 1043456
        %v1182 = vrot.slane %v818, 4
        %v1183 = vrot.slane %v819, 4
        %v1184 = vsel %vm1181, %v1182, %v1183
        %v1187 = vsel %vm1181, 0.0, %v1182
        %v1188 = vpack.c.bf16 %v1184, %v1187
        %v1189 = vld [vmem:[%s10] sm:$0xf]
        %v1190 = vld [vmem:[%s10 + $0x4] sm:$0xf]
        %v1191 = vld [vmem:[%s10 + $0x8] sm:$0xf]
        %v1192 = vld [vmem:[%s10 + $0xc] sm:$0xf]
        %v1193 = vld [vmem:[%s10 + $0x10] sm:$0xf]
        %v1194 = vld [vmem:[%s10 + $0x14] sm:$0xf]
        %v1195 = vld [vmem:[%s10 + $0x18] sm:$0xf]
        %v1196 = vld [vmem:[%s10 + $0x1c] sm:$0xf]
        %v1205 = vunpack.c.l.b16 %v1189
        %v1206 = vunpack.c.l.b16 %v1190
        %v1207 = vunpack.c.l.b16 %v1191
        %v1208 = vunpack.c.l.b16 %v1192
        %v1209 = vunpack.c.l.b16 %v1193
        %v1210 = vunpack.c.l.b16 %v1194
        %v1211 = vunpack.c.l.b16 %v1195
        %v1212 = vunpack.c.l.b16 %v1196
        %v1213 = vpack.c.b16 %v1206, %v1205
        %v1214 = vpack.c.b16 %v1208, %v1207
        %v1215 = vpack.c.b16 %v1210, %v1209
        %v1216 = vpack.c.b16 %v1212, %v1211
        %v1222 = vsel %vm853, %v1188, 0
        %1224 = vmatpush.bf16.msra.mxu0 0
        %1225 = vmatpush.bf16.msra.mxu0 0
        %1226 = vmatpush.bf16.msra.mxu0 0
        %1227 = vmatpush.bf16.msra.mxu0 0
        %1228 = vmatpush.bf16.msra.mxu0 %v1216
        %1229 = vmatpush.bf16.msra.mxu0 %v1215
        %1230 = vmatpush.bf16.msra.mxu0 %v1214
        %1231 = vmatpush.bf16.msra.mxu0 %v1213
        %1232 = vmatmul.bf16.gmra.mxu0 %v1222
        %v1233 = vpop.f32.mrf.mxu0
        %v1234 = vadd.f32 0.0, %v1233
        %v1235 = vpop.f32.mrf.mxu0
        %v1236 = vadd.f32 0.0, %v1235
        %1237 = vdwg.mxu0
        %1240 = vrot.lane.b32.xlu0 %v1234, 32
        %v1241 = vpop.permute.xlu0 %1240
        %1242 = vrot.lane.b32.xlu0 %v1236, 32
        %v1243 = vpop.permute.xlu0 %1242
        %v1246 = vadd.f32 %v1179, %v1241
        %v1247 = vadd.f32 %v1180, %v1243
        %v1249 = vsel %vm1181, %v1183, 0.0
        %v1250 = vpack.c.bf16 %v1249, %v1184
        %s1251 = scalar_lea.vmem %s10, 32
        %v1252 = vld [vmem:[%s1251] sm:$0xf]
        %v1253 = vld [vmem:[%s1251 + $0x4] sm:$0xf]
        %v1254 = vld [vmem:[%s1251 + $0x8] sm:$0xf]
        %v1255 = vld [vmem:[%s1251 + $0xc] sm:$0xf]
        %v1256 = vld [vmem:[%s1251 + $0x10] sm:$0xf]
        %v1257 = vld [vmem:[%s1251 + $0x14] sm:$0xf]
        %v1258 = vld [vmem:[%s1251 + $0x18] sm:$0xf]
        %v1259 = vld [vmem:[%s1251 + $0x1c] sm:$0xf]
        %v1268 = vunpack.c.l.b16 %v1252
        %v1269 = vunpack.c.l.b16 %v1253
        %v1270 = vunpack.c.l.b16 %v1254
        %v1271 = vunpack.c.l.b16 %v1255
        %v1272 = vunpack.c.l.b16 %v1256
        %v1273 = vunpack.c.l.b16 %v1257
        %v1274 = vunpack.c.l.b16 %v1258
        %v1275 = vunpack.c.l.b16 %v1259
        %v1276 = vpack.c.b16 %v1269, %v1268
        %v1277 = vpack.c.b16 %v1271, %v1270
        %v1278 = vpack.c.b16 %v1273, %v1272
        %v1279 = vpack.c.b16 %v1275, %v1274
        %v1285 = vsel %vm853, %v1250, 0
        %1287 = vmatpush.bf16.msra.mxu0 0
        %1288 = vmatpush.bf16.msra.mxu0 0
        %1289 = vmatpush.bf16.msra.mxu0 0
        %1290 = vmatpush.bf16.msra.mxu0 0
        %1291 = vmatpush.bf16.msra.mxu0 %v1279
        %1292 = vmatpush.bf16.msra.mxu0 %v1278
        %1293 = vmatpush.bf16.msra.mxu0 %v1277
        %1294 = vmatpush.bf16.msra.mxu0 %v1276
        %1295 = vmatmul.bf16.gmra.mxu0 %v1285
        %v1296 = vpop.f32.mrf.mxu0
        %v1297 = vadd.f32 0.0, %v1296
        %v1298 = vpop.f32.mrf.mxu0
        %v1299 = vadd.f32 0.0, %v1298
        %1300 = vdwg.mxu0
        %1303 = vrot.lane.b32.xlu0 %v1297, 32
        %v1304 = vpop.permute.xlu0 %1303
        %1305 = vrot.lane.b32.xlu0 %v1299, 32
        %v1306 = vpop.permute.xlu0 %1305
        %v1309 = vadd.f32 %v1246, %v1304
        %v1310 = vadd.f32 %v1247, %v1306
        %v1311 = vmax.f32 %v1309, 0.0
        %v1312 = vmax.f32 %v1310, 0.0
        %v1313 = vld [vmem:[%s12] sm:$0x1]
        %v1315 = vperm.slane %v1313, 0
        %1316 = vrot.lane.b32.xlu0 %v1315, 32
        %v1317 = vpop.permute.xlu0 %1316
        %v1319 = vmul.f32 %v1311, %v1317
        %v1320 = vmul.f32 %v1312, %v1317
        %v1321 = vld [vmem:[%s13] sm:$0x1]
        %v1323 = vperm.slane %v1321, 0
        %1324 = vrot.lane.b32.xlu0 %v1323, 32
        %v1325 = vpop.permute.xlu0 %1324
        %v1327 = vadd.f32 %v1319, %v1325
        %v1328 = vadd.f32 %v1320, %v1325
        %v1329 = vmax.f32 %v867, 0.0
        %v1330 = vmax.f32 %v869, 0.0
        %v1331 = vpack.c.bf16 %v1330, %v1329
        %v1332 = vld [vmem:[%s14] sm:$0xf]
        %v1333 = vld [vmem:[%s14 + $0x4] sm:$0xf]
        %v1334 = vld [vmem:[%s15] sm:$0x1]
        %v1336 = vperm.slane %v1334, 0
        %1339 = vrot.lane.b32.xlu0 %v1331, 80
        %v1340 = vpop.permute.xlu0 %1339
        %v1343 = vunpack.c.l.b16 %v1332
        %v1344 = vunpack.c.l.b16 %v1333
        %v1345 = vpack.c.b16 %v1344, %v1343
        %vm1347 = vcmask 130048
        %v1349 = vsel %vm1347, %v1340, 0
        %1351 = vmatpush.bf16.msra.mxu0 0
        %1352 = vmatpush.bf16.msra.mxu0 0
        %1353 = vmatpush.bf16.msra.mxu0 0
        %1354 = vmatpush.bf16.msra.mxu0 0
        %1355 = vmatpush.bf16.msra.mxu0 0
        %1356 = vmatpush.bf16.msra.mxu0 0
        %1357 = vmatpush.bf16.msra.mxu0 0
        %1358 = vmatpush.bf16.msra.mxu0 %v1345
        %1359 = vmatmul.bf16.gmra.mxu0 %v1349
        %v1360 = vpop.f32.mrf.mxu0
        %v1361 = vadd.f32 %v1336, %v1360
        %v1362 = vpop.f32.mrf.mxu0
        %v1363 = vadd.f32 %v1336, %v1362
        %1364 = vdwg.mxu0
        %v1365 = vld [vmem:[%s16] sm:$0xf]
        %v1366 = vld [vmem:[%s16 + $0x4] sm:$0xf]
        %v1367 = vld [vmem:[%s17] sm:$0x1]
        %v1369 = vperm.slane %v1367, 0
        %v1373 = vunpack.c.l.b16 %v1365
        %v1374 = vunpack.c.l.b16 %v1366
        %v1375 = vpack.c.b16 %v1374, %v1373
        %1377 = vmatpush.bf16.msra.mxu0 0
        %1378 = vmatpush.bf16.msra.mxu0 0
        %1379 = vmatpush.bf16.msra.mxu0 0
        %1380 = vmatpush.bf16.msra.mxu0 0
        %1381 = vmatpush.bf16.msra.mxu0 0
        %1382 = vmatpush.bf16.msra.mxu0 0
        %1383 = vmatpush.bf16.msra.mxu0 0
        %1384 = vmatpush.bf16.msra.mxu0 %v1375
        %1385 = vmatmul.bf16.gmra.mxu0 %v1349
        %v1386 = vpop.f32.mrf.mxu0
        %v1387 = vadd.f32 %v1369, %v1386
        %v1388 = vpop.f32.mrf.mxu0
        %v1389 = vadd.f32 %v1369, %v1388
        %1390 = vdwg.mxu0
        %v1391 = vld [vmem:[%s18] sm:$0xf]
        %v1392 = vld [vmem:[%s18 + $0x4] sm:$0xf]
        %v1393 = vld [vmem:[%s19] sm:$0x1]
        %v1395 = vperm.slane %v1393, 0
        %v1399 = vunpack.c.l.b16 %v1391
        %v1400 = vunpack.c.l.b16 %v1392
        %v1401 = vpack.c.b16 %v1400, %v1399
        %1403 = vmatpush.bf16.msra.mxu0 0
        %1404 = vmatpush.bf16.msra.mxu0 0
        %1405 = vmatpush.bf16.msra.mxu0 0
        %1406 = vmatpush.bf16.msra.mxu0 0
        %1407 = vmatpush.bf16.msra.mxu0 0
        %1408 = vmatpush.bf16.msra.mxu0 0
        %1409 = vmatpush.bf16.msra.mxu0 0
        %1410 = vmatpush.bf16.msra.mxu0 %v1401
        %1411 = vmatmul.bf16.gmra.mxu0 %v1349
        %v1412 = vpop.f32.mrf.mxu0
        %v1413 = vadd.f32 %v1395, %v1412
        %v1414 = vpop.f32.mrf.mxu0
        %v1415 = vadd.f32 %v1395, %v1414
        %1416 = vdwg.mxu0
        %1417 = vxpose.xlu0.b32.start [1/16] %v1413, 128
        %1418 = vxpose.xlu0.b32.cont [2/16] %v1415, 128
        %1419 = vxpose.xlu0.b32.cont [3/16] 0.0, 128
        %1420 = vxpose.xlu0.b32.cont [4/16] 0.0, 128
        %1421 = vxpose.xlu0.b32.cont [5/16] 0.0, 128
        %1422 = vxpose.xlu0.b32.cont [6/16] 0.0, 128
        %1423 = vxpose.xlu0.b32.cont [7/16] 0.0, 128
        %1424 = vxpose.xlu0.b32.cont [8/16] 0.0, 128
        %1425 = vxpose.xlu0.b32.cont [9/16] 0.0, 128
        %1426 = vxpose.xlu0.b32.cont [10/16] 0.0, 128
        %1427 = vxpose.xlu0.b32.cont [11/16] 0.0, 128
        %1428 = vxpose.xlu0.b32.cont [12/16] 0.0, 128
        %1429 = vxpose.xlu0.b32.cont [13/16] 0.0, 128
        %1430 = vxpose.xlu0.b32.cont [14/16] 0.0, 128
        %1431 = vxpose.xlu0.b32.cont [15/16] 0.0, 128
        %1432 = vxpose.xlu0.b32.end [16/16] 0.0, 128
        %v1433 = vpop.trf.xlu0
        %v1434 = vpop.trf.xlu0
        %v1435 = vpop.trf.xlu0
        %v1436 = vpop.trf.xlu0
        %v1437 = vpop.trf.xlu0
        %v1438 = vpop.trf.xlu0
        %v1439 = vpop.trf.xlu0
        %v1440 = vpop.trf.xlu0
        %v1441 = vpop.trf.xlu0
        %v1442 = vpop.trf.xlu0
        %v1443 = vpop.trf.xlu0
        %v1444 = vpop.trf.xlu0
        %v1445 = vpop.trf.xlu0
        %v1446 = vpop.trf.xlu0
        %v1447 = vpop.trf.xlu0
        %v1448 = vpop.trf.xlu0
        %v1449 = vpack.c.bf16 %v1433, %v1433
        %v1450 = vpack.c.bf16 %v1363, %v1361
        %v1452 = vsel %vm1347, %v1449, 0
        %1454 = vmatpush.bf16.msra.mxu0 0
        %1455 = vmatpush.bf16.msra.mxu0 0
        %1456 = vmatpush.bf16.msra.mxu0 0
        %1457 = vmatpush.bf16.msra.mxu0 0
        %1458 = vmatpush.bf16.msra.mxu0 0
        %1459 = vmatpush.bf16.msra.mxu0 0
        %1460 = vmatpush.bf16.msra.mxu0 0
        %1461 = vmatpush.bf16.msra.mxu0 %v1450
        %1462 = vmatmul.bf16.gmra.mxu0 %v1452
        %v1463 = vpop.f32.mrf.mxu0
        %v1464 = vadd.f32 0.0, %v1463
        %v1465 = vpop.f32.mrf.mxu0
        %1466 = vdwg.mxu0
        %v1467 = vpack.c.bf16 %v1389, %v1387
        %v1468 = vpack.c.bf16 %v1464, %v1464
        %vm1469 = vcmask 64512
        %v1471 = vsel %vm1469, %v1467, 0
        %v1474 = vsel %vm1181, %v1468, 0
        %1476 = vmatpush.bf16.msra.mxu0 0
        %1477 = vmatpush.bf16.msra.mxu0 0
        %1478 = vmatpush.bf16.msra.mxu0 0
        %1479 = vmatpush.bf16.msra.mxu0 0
        %1480 = vmatpush.bf16.msra.mxu0 0
        %1481 = vmatpush.bf16.msra.mxu0 0
        %1482 = vmatpush.bf16.msra.mxu0 0
        %1483 = vmatpush.bf16.msra.mxu0 %v1474
        %1484 = vmatmul.bf16.gmra.mxu0 %v1471
        %v1485 = vpop.f32.mrf.mxu0
        %v1486 = vadd.f32 0.0, %v1485
        %v1487 = vpop.f32.mrf.mxu0
        %v1488 = vadd.f32 0.0, %v1487
        %1489 = vdwg.mxu0
        %v1490 = vmul.f32 %v1486, 0.0625
        %v1491 = vmul.f32 %v1488, 0.0625
        %v1492 = vpack.c.bf16 %v1491, %v1490
        %v1493 = vld [vmem:[%s20] sm:$0xf]
        %v1494 = vld [vmem:[%s21] sm:$0x1]
        %v1496 = vperm.slane %v1494, 0
        %v1499 = vsel %vm1469, %v1492, 0
        %v1502 = vsel %vm1181, %v1493, 0
        %1504 = vmatpush.bf16.msra.mxu0 0
        %1505 = vmatpush.bf16.msra.mxu0 0
        %1506 = vmatpush.bf16.msra.mxu0 0
        %1507 = vmatpush.bf16.msra.mxu0 0
        %1508 = vmatpush.bf16.msra.mxu0 0
        %1509 = vmatpush.bf16.msra.mxu0 0
        %1510 = vmatpush.bf16.msra.mxu0 0
        %1511 = vmatpush.bf16.msra.mxu0 %v1502
        %1512 = vmatmul.bf16.gmra.mxu0 %v1499
        %v1513 = vpop.f32.mrf.mxu0
        %v1514 = vadd.f32 %v1496, %v1513
        %v1515 = vpop.f32.mrf.mxu0
        %v1516 = vadd.f32 %v1496, %v1515
        %1517 = vdwg.mxu0
        %v1518 = vld [vmem:[%s22] sm:$0x1]
        %v1520 = vperm.slane %v1518, 0
        %v1522 = vmul.f32 %v1514, %v1520
        %v1523 = vmul.f32 %v1516, %v1520
        %v1524 = vld [vmem:[%s23] sm:$0x1]
        %v1526 = vperm.slane %v1524, 0
        %v1528 = vadd.f32 %v1522, %v1526
        %v1529 = vadd.f32 %v1523, %v1526
        %1532 = vrot.lane.b32.xlu0 %v1329, 80
        %v1533 = vpop.permute.xlu0 %1532
        %1534 = vrot.lane.b32.xlu0 %v1330, 80
        %v1535 = vpop.permute.xlu0 %1534
        %v1538 = vadd.f32 %v1528, %v1533
        %v1539 = vadd.f32 %v1529, %v1535
        %v1542 = vrot.slane %v1010, 7
        %v1543 = vrot.slane %v1011, 7
        %v1544 = vsel %vm879, %v1542, %v1543
        %v1547 = vsel %vm879, 0.0, %v1542
        %v1548 = vpack.c.bf16 %v1544, %v1547
        %v1549 = vld [vmem:[%s24] sm:$0xf]
        %v1550 = vld [vmem:[%s24 + $0x4] sm:$0xf]
        %v1551 = vpack.c.bf16 %v1011, %v1010
        %s1552 = scalar_lea.vmem %s24, 32
        %v1553 = vld [vmem:[%s1552] sm:$0xf]
        %v1554 = vld [vmem:[%s1552 + $0x4] sm:$0xf]
        %v1557 = vunpack.c.l.b16 %v1553
        %v1558 = vunpack.c.l.b16 %v1554
        %v1559 = vpack.c.b16 %v1558, %v1557
        %v1562 = vsel %vm1347, %v1551, 0
        %1564 = vmatpush.bf16.msra.mxu0 0
        %1565 = vmatpush.bf16.msra.mxu0 0
        %1566 = vmatpush.bf16.msra.mxu0 0
        %1567 = vmatpush.bf16.msra.mxu0 0
        %1568 = vmatpush.bf16.msra.mxu0 0
        %1569 = vmatpush.bf16.msra.mxu0 0
        %1570 = vmatpush.bf16.msra.mxu0 0
        %1571 = vmatpush.bf16.msra.mxu0 %v1559
        %1572 = vmatmul.bf16.gmra.mxu0 %v1562
        %v1573 = vpop.f32.mrf.mxu0
        %v1574 = vadd.f32 0.0, %v1573
        %v1575 = vpop.f32.mrf.mxu0
        %v1576 = vadd.f32 0.0, %v1575
        %1577 = vdwg.mxu0
        %v1580 = vunpack.c.l.b16 %v1549
        %v1581 = vunpack.c.l.b16 %v1550
        %v1582 = vpack.c.b16 %v1581, %v1580
        %v1585 = vsel %vm1347, %v1548, 0
        %1587 = vmatpush.bf16.msra.mxu0 0
        %1588 = vmatpush.bf16.msra.mxu0 0
        %1589 = vmatpush.bf16.msra.mxu0 0
        %1590 = vmatpush.bf16.msra.mxu0 0
        %1591 = vmatpush.bf16.msra.mxu0 0
        %1592 = vmatpush.bf16.msra.mxu0 0
        %1593 = vmatpush.bf16.msra.mxu0 0
        %1594 = vmatpush.bf16.msra.mxu0 %v1582
        %1595 = vmatmul.bf16.gmra.mxu0 %v1585
        %v1596 = vpop.f32.mrf.mxu0
        %v1597 = vadd.f32 %v1574, %v1596
        %v1598 = vpop.f32.mrf.mxu0
        %v1599 = vadd.f32 %v1576, %v1598
        %1600 = vdwg.mxu0
        %v1601 = vrot.slane %v1010, 1
        %v1602 = vrot.slane %v1011, 1
        %v1603 = vsel %vm938, %v1601, %v1602
        %v1606 = vsel %vm938, %v1602, 0.0
        %v1607 = vpack.c.bf16 %v1606, %v1603
        %s1608 = scalar_lea.vmem %s24, 64
        %v1609 = vld [vmem:[%s1608] sm:$0xf]
        %v1610 = vld [vmem:[%s1608 + $0x4] sm:$0xf]
        %v1613 = vunpack.c.l.b16 %v1609
        %v1614 = vunpack.c.l.b16 %v1610
        %v1615 = vpack.c.b16 %v1614, %v1613
        %v1618 = vsel %vm1347, %v1607, 0
        %1620 = vmatpush.bf16.msra.mxu0 0
        %1621 = vmatpush.bf16.msra.mxu0 0
        %1622 = vmatpush.bf16.msra.mxu0 0
        %1623 = vmatpush.bf16.msra.mxu0 0
        %1624 = vmatpush.bf16.msra.mxu0 0
        %1625 = vmatpush.bf16.msra.mxu0 0
        %1626 = vmatpush.bf16.msra.mxu0 0
        %1627 = vmatpush.bf16.msra.mxu0 %v1615
        %1628 = vmatmul.bf16.gmra.mxu0 %v1618
        %v1629 = vpop.f32.mrf.mxu0
        %v1630 = vadd.f32 0.0, %v1629
        %v1631 = vpop.f32.mrf.mxu0
        %v1632 = vadd.f32 0.0, %v1631
        %1633 = vdwg.mxu0
        %v1634 = vadd.f32 %v1597, %v1630
        %v1635 = vadd.f32 %v1599, %v1632
        %v1638 = vrot.slane %v1171, 7
        %v1639 = vrot.slane %v1172, 7
        %v1640 = vsel %vm879, %v1638, %v1639
        %1641 = vrot.lane.b32.xlu0 %v1638, 112
        %v1642 = vpop.permute.xlu0 %1641
        %1643 = vrot.lane.b32.xlu0 %v1640, 112
        %v1644 = vpop.permute.xlu0 %1643
        %v1647 = vsel %vm879, 0.0, %v1642
        %v1648 = vpack.c.bf16 %v1644, %v1647
        %s1649 = scalar_lea.vmem %s24, 8
        %v1650 = vld [vmem:[%s1649] sm:$0xf]
        %v1651 = vld [vmem:[%s1649 + $0x4] sm:$0xf]
        %v1654 = vunpack.c.l.b16 %v1650
        %v1655 = vunpack.c.l.b16 %v1651
        %v1656 = vpack.c.b16 %v1655, %v1654
        %v1659 = vsel %vm1347, %v1648, 0
        %1661 = vmatpush.bf16.msra.mxu0 0
        %1662 = vmatpush.bf16.msra.mxu0 0
        %1663 = vmatpush.bf16.msra.mxu0 0
        %1664 = vmatpush.bf16.msra.mxu0 0
        %1665 = vmatpush.bf16.msra.mxu0 0
        %1666 = vmatpush.bf16.msra.mxu0 0
        %1667 = vmatpush.bf16.msra.mxu0 0
        %1668 = vmatpush.bf16.msra.mxu0 %v1656
        %1669 = vmatmul.bf16.gmra.mxu0 %v1659
        %v1670 = vpop.f32.mrf.mxu0
        %v1671 = vadd.f32 0.0, %v1670
        %v1672 = vpop.f32.mrf.mxu0
        %v1673 = vadd.f32 0.0, %v1672
        %1674 = vdwg.mxu0
        %v1675 = vadd.f32 %v1634, %v1671
        %v1676 = vadd.f32 %v1635, %v1673
        %v1677 = vpack.c.bf16 %v1172, %v1171
        %s1678 = scalar_lea.vmem %s24, 40
        %v1679 = vld [vmem:[%s1678] sm:$0xf]
        %v1680 = vld [vmem:[%s1678 + $0x4] sm:$0xf]
        %1682 = vrot.lane.b32.xlu0 %v1677, 112
        %v1683 = vpop.permute.xlu0 %1682
        %v1686 = vunpack.c.l.b16 %v1679
        %v1687 = vunpack.c.l.b16 %v1680
        %v1688 = vpack.c.b16 %v1687, %v1686
        %v1691 = vsel %vm1347, %v1683, 0
        %1693 = vmatpush.bf16.msra.mxu0 0
        %1694 = vmatpush.bf16.msra.mxu0 0
        %1695 = vmatpush.bf16.msra.mxu0 0
        %1696 = vmatpush.bf16.msra.mxu0 0
        %1697 = vmatpush.bf16.msra.mxu0 0
        %1698 = vmatpush.bf16.msra.mxu0 0
        %1699 = vmatpush.bf16.msra.mxu0 0
        %1700 = vmatpush.bf16.msra.mxu0 %v1688
        %1701 = vmatmul.bf16.gmra.mxu0 %v1691
        %v1702 = vpop.f32.mrf.mxu0
        %v1703 = vadd.f32 0.0, %v1702
        %v1704 = vpop.f32.mrf.mxu0
        %v1705 = vadd.f32 0.0, %v1704
        %1706 = vdwg.mxu0
        %v1707 = vadd.f32 %v1675, %v1703
        %v1708 = vadd.f32 %v1676, %v1705
        %v1709 = vrot.slane %v1171, 1
        %v1710 = vrot.slane %v1172, 1
        %v1711 = vsel %vm938, %v1709, %v1710
        %v1714 = vsel %vm938, %v1710, 0.0
        %v1715 = vpack.c.bf16 %v1714, %v1711
        %s1716 = scalar_lea.vmem %s24, 72
        %v1717 = vld [vmem:[%s1716] sm:$0xf]
        %v1718 = vld [vmem:[%s1716 + $0x4] sm:$0xf]
        %1720 = vrot.lane.b32.xlu0 %v1715, 112
        %v1721 = vpop.permute.xlu0 %1720
        %v1724 = vunpack.c.l.b16 %v1717
        %v1725 = vunpack.c.l.b16 %v1718
        %v1726 = vpack.c.b16 %v1725, %v1724
        %v1729 = vsel %vm1347, %v1721, 0
        %1731 = vmatpush.bf16.msra.mxu0 0
        %1732 = vmatpush.bf16.msra.mxu0 0
        %1733 = vmatpush.bf16.msra.mxu0 0
        %1734 = vmatpush.bf16.msra.mxu0 0
        %1735 = vmatpush.bf16.msra.mxu0 0
        %1736 = vmatpush.bf16.msra.mxu0 0
        %1737 = vmatpush.bf16.msra.mxu0 0
        %1738 = vmatpush.bf16.msra.mxu0 %v1726
        %1739 = vmatmul.bf16.gmra.mxu0 %v1729
        %v1740 = vpop.f32.mrf.mxu0
        %v1741 = vadd.f32 0.0, %v1740
        %v1742 = vpop.f32.mrf.mxu0
        %v1743 = vadd.f32 0.0, %v1742
        %1744 = vdwg.mxu0
        %v1745 = vadd.f32 %v1707, %v1741
        %v1746 = vadd.f32 %v1708, %v1743
        %v1749 = vrot.slane %v1327, 7
        %v1750 = vrot.slane %v1328, 7
        %v1751 = vsel %vm879, %v1749, %v1750
        %1752 = vrot.lane.b32.xlu0 %v1749, 96
        %v1753 = vpop.permute.xlu0 %1752
        %1754 = vrot.lane.b32.xlu0 %v1751, 96
        %v1755 = vpop.permute.xlu0 %1754
        %v1758 = vsel %vm879, 0.0, %v1753
        %v1759 = vpack.c.bf16 %v1755, %v1758
        %s1760 = scalar_lea.vmem %s24, 16
        %v1761 = vld [vmem:[%s1760] sm:$0xf]
        %v1762 = vld [vmem:[%s1760 + $0x4] sm:$0xf]
        %v1765 = vunpack.c.l.b16 %v1761
        %v1766 = vunpack.c.l.b16 %v1762
        %v1767 = vpack.c.b16 %v1766, %v1765
        %v1770 = vsel %vm1347, %v1759, 0
        %1772 = vmatpush.bf16.msra.mxu0 0
        %1773 = vmatpush.bf16.msra.mxu0 0
        %1774 = vmatpush.bf16.msra.mxu0 0
        %1775 = vmatpush.bf16.msra.mxu0 0
        %1776 = vmatpush.bf16.msra.mxu0 0
        %1777 = vmatpush.bf16.msra.mxu0 0
        %1778 = vmatpush.bf16.msra.mxu0 0
        %1779 = vmatpush.bf16.msra.mxu0 %v1767
        %1780 = vmatmul.bf16.gmra.mxu0 %v1770
        %v1781 = vpop.f32.mrf.mxu0
        %v1782 = vadd.f32 0.0, %v1781
        %v1783 = vpop.f32.mrf.mxu0
        %v1784 = vadd.f32 0.0, %v1783
        %1785 = vdwg.mxu0
        %v1786 = vadd.f32 %v1745, %v1782
        %v1787 = vadd.f32 %v1746, %v1784
        %v1788 = vpack.c.bf16 %v1328, %v1327
        %s1789 = scalar_lea.vmem %s24, 48
        %v1790 = vld [vmem:[%s1789] sm:$0xf]
        %v1791 = vld [vmem:[%s1789 + $0x4] sm:$0xf]
        %1793 = vrot.lane.b32.xlu0 %v1788, 96
        %v1794 = vpop.permute.xlu0 %1793
        %v1797 = vunpack.c.l.b16 %v1790
        %v1798 = vunpack.c.l.b16 %v1791
        %v1799 = vpack.c.b16 %v1798, %v1797
        %v1802 = vsel %vm1347, %v1794, 0
        %1804 = vmatpush.bf16.msra.mxu0 0
        %1805 = vmatpush.bf16.msra.mxu0 0
        %1806 = vmatpush.bf16.msra.mxu0 0
        %1807 = vmatpush.bf16.msra.mxu0 0
        %1808 = vmatpush.bf16.msra.mxu0 0
        %1809 = vmatpush.bf16.msra.mxu0 0
        %1810 = vmatpush.bf16.msra.mxu0 0
        %1811 = vmatpush.bf16.msra.mxu0 %v1799
        %1812 = vmatmul.bf16.gmra.mxu0 %v1802
        %v1813 = vpop.f32.mrf.mxu0
        %v1814 = vadd.f32 0.0, %v1813
        %v1815 = vpop.f32.mrf.mxu0
        %v1816 = vadd.f32 0.0, %v1815
        %1817 = vdwg.mxu0
        %v1818 = vadd.f32 %v1786, %v1814
        %v1819 = vadd.f32 %v1787, %v1816
        %v1820 = vrot.slane %v1327, 1
        %v1821 = vrot.slane %v1328, 1
        %v1822 = vsel %vm938, %v1820, %v1821
        %v1825 = vsel %vm938, %v1821, 0.0
        %v1826 = vpack.c.bf16 %v1825, %v1822
        %s1827 = scalar_lea.vmem %s24, 80
        %v1828 = vld [vmem:[%s1827] sm:$0xf]
        %v1829 = vld [vmem:[%s1827 + $0x4] sm:$0xf]
        %1831 = vrot.lane.b32.xlu0 %v1826, 96
        %v1832 = vpop.permute.xlu0 %1831
        %v1835 = vunpack.c.l.b16 %v1828
        %v1836 = vunpack.c.l.b16 %v1829
        %v1837 = vpack.c.b16 %v1836, %v1835
        %v1840 = vsel %vm1347, %v1832, 0
        %1842 = vmatpush.bf16.msra.mxu0 0
        %1843 = vmatpush.bf16.msra.mxu0 0
        %1844 = vmatpush.bf16.msra.mxu0 0
        %1845 = vmatpush.bf16.msra.mxu0 0
        %1846 = vmatpush.bf16.msra.mxu0 0
        %1847 = vmatpush.bf16.msra.mxu0 0
        %1848 = vmatpush.bf16.msra.mxu0 0
        %1849 = vmatpush.bf16.msra.mxu0 %v1837
        %1850 = vmatmul.bf16.gmra.mxu0 %v1840
        %v1851 = vpop.f32.mrf.mxu0
        %v1852 = vadd.f32 0.0, %v1851
        %v1853 = vpop.f32.mrf.mxu0
        %v1854 = vadd.f32 0.0, %v1853
        %1855 = vdwg.mxu0
        %v1856 = vadd.f32 %v1818, %v1852
        %v1857 = vadd.f32 %v1819, %v1854
        %v1860 = vrot.slane %v1538, 7
        %v1861 = vrot.slane %v1539, 7
        %v1862 = vsel %vm879, %v1860, %v1861
        %v1865 = vsel %vm879, 0.0, %v1860
        %v1866 = vpack.c.bf16 %v1862, %v1865
        %s1867 = scalar_lea.vmem %s24, 24
        %v1868 = vld [vmem:[%s1867] sm:$0xf]
        %v1869 = vld [vmem:[%s1867 + $0x4] sm:$0xf]
        %v1872 = vunpack.c.l.b16 %v1868
        %v1873 = vunpack.c.l.b16 %v1869
        %v1874 = vpack.c.b16 %v1873, %v1872
        %v1877 = vsel %vm1347, %v1866, 0
        %1879 = vmatpush.bf16.msra.mxu0 0
        %1880 = vmatpush.bf16.msra.mxu0 0
        %1881 = vmatpush.bf16.msra.mxu0 0
        %1882 = vmatpush.bf16.msra.mxu0 0
        %1883 = vmatpush.bf16.msra.mxu0 0
        %1884 = vmatpush.bf16.msra.mxu0 0
        %1885 = vmatpush.bf16.msra.mxu0 0
        %1886 = vmatpush.bf16.msra.mxu0 %v1874
        %1887 = vmatmul.bf16.gmra.mxu0 %v1877
        %v1888 = vpop.f32.mrf.mxu0
        %v1889 = vadd.f32 0.0, %v1888
        %v1890 = vpop.f32.mrf.mxu0
        %v1891 = vadd.f32 0.0, %v1890
        %1892 = vdwg.mxu0
        %v1893 = vadd.f32 %v1856, %v1889
        %v1894 = vadd.f32 %v1857, %v1891
        %v1895 = vpack.c.bf16 %v1539, %v1538
        %s1896 = scalar_lea.vmem %s24, 56
        %v1897 = vld [vmem:[%s1896] sm:$0xf]
        %v1898 = vld [vmem:[%s1896 + $0x4] sm:$0xf]
        %v1901 = vunpack.c.l.b16 %v1897
        %v1902 = vunpack.c.l.b16 %v1898
        %v1903 = vpack.c.b16 %v1902, %v1901
        %v1906 = vsel %vm1347, %v1895, 0
        %1908 = vmatpush.bf16.msra.mxu0 0
        %1909 = vmatpush.bf16.msra.mxu0 0
        %1910 = vmatpush.bf16.msra.mxu0 0
        %1911 = vmatpush.bf16.msra.mxu0 0
        %1912 = vmatpush.bf16.msra.mxu0 0
        %1913 = vmatpush.bf16.msra.mxu0 0
        %1914 = vmatpush.bf16.msra.mxu0 0
        %1915 = vmatpush.bf16.msra.mxu0 %v1903
        %1916 = vmatmul.bf16.gmra.mxu0 %v1906
        %v1917 = vpop.f32.mrf.mxu0
        %v1918 = vadd.f32 0.0, %v1917
        %v1919 = vpop.f32.mrf.mxu0
        %v1920 = vadd.f32 0.0, %v1919
        %1921 = vdwg.mxu0
        %v1922 = vadd.f32 %v1893, %v1918
        %v1923 = vadd.f32 %v1894, %v1920
        %v1924 = vrot.slane %v1538, 1
        %v1925 = vrot.slane %v1539, 1
        %v1926 = vsel %vm938, %v1924, %v1925
        %v1929 = vsel %vm938, %v1925, 0.0
        %v1930 = vpack.c.bf16 %v1929, %v1926
        %s1931 = scalar_lea.vmem %s24, 88
        %v1932 = vld [vmem:[%s1931] sm:$0xf]
        %v1933 = vld [vmem:[%s1931 + $0x4] sm:$0xf]
        %v1936 = vunpack.c.l.b16 %v1932
        %v1937 = vunpack.c.l.b16 %v1933
        %v1938 = vpack.c.b16 %v1937, %v1936
        %v1941 = vsel %vm1347, %v1930, 0
        %1943 = vmatpush.bf16.msra.mxu0 0
        %1944 = vmatpush.bf16.msra.mxu0 0
        %1945 = vmatpush.bf16.msra.mxu0 0
        %1946 = vmatpush.bf16.msra.mxu0 0
        %1947 = vmatpush.bf16.msra.mxu0 0
        %1948 = vmatpush.bf16.msra.mxu0 0
        %1949 = vmatpush.bf16.msra.mxu0 0
        %1950 = vmatpush.bf16.msra.mxu0 %v1938
        %1951 = vmatmul.bf16.gmra.mxu0 %v1941
        %v1952 = vpop.f32.mrf.mxu0
        %v1953 = vadd.f32 0.0, %v1952
        %v1954 = vpop.f32.mrf.mxu0
        %v1955 = vadd.f32 0.0, %v1954
        %1956 = vdwg.mxu0
        %v1957 = vadd.f32 %v1922, %v1953
        %v1958 = vadd.f32 %v1923, %v1955
        %v1959 = vmax.f32 %v1957, 0.0
        %v1960 = vmax.f32 %v1958, 0.0
        %v1961 = vld [vmem:[%s25] sm:$0x1]
        %v1963 = vperm.slane %v1961, 0
        %v1965 = vmul.f32 %v1959, %v1963
        %v1966 = vmul.f32 %v1960, %v1963
        %v1967 = vld [vmem:[%s26] sm:$0x1]
        %v1969 = vperm.slane %v1967, 0
        %v1971 = vadd.f32 %v1965, %v1969
        %v1972 = vadd.f32 %v1966, %v1969
        %v1973 = vadd.f32 %v1971, %v818
        %v1974 = vadd.f32 %v1972, %v819
        %1975 = vst.msk [vmem:[%s811] sm:$0xff] %vm853, %v1973
        %1976 = vst.msk [vmem:[%s811 + $0x8] sm:$0xff] %vm853, %v1974
        %s1977 = sand.u32 %s621, 1
        %s1978 = scalar_lea.sflag [#allocation3], %s1977
        %s1979 = sand.u32 %s621, 1
        %s1980 = smul.addr %s1979, 16
        %s1981 = scalar_lea.vmem [#allocation2], %s1980
        // Predicated region
        $region129: #{tpu_custom_call.1} parent=127 // pred_check
          %p1982 = pneg %p631
        $region130: #{tpu_custom_call.1} parent=127 // pred_check_branch
          %1984 = sbr.rel (%p1982) target = $region132
        $region131: #{tpu_custom_call.1} parent=127 // pred_region
          %1986 = vsyncadd %s1978, 0
          %s1987 = smul.addr %s41, 2
          %s1988 = smul.addr %s1987, 8
          %s1989 = scalar_lea.hbm %s27, %s1988
          %s1990 = sshll.u32 %s1981, 4
          %s1991 = int_to_ptr.vmem [resolvable:$true] %s1990
          %s1992 = sshll.u32 %s1989, 4
          %s1993 = int_to_ptr.hbm [resolvable:$true] %s1992
          %1998 = dma.vmem_to_hbm [thread:$0]  %s1991, 256, %s1993, %s1978, 128, 128, 8
        $region132: #{tpu_custom_call.1} parent=127 // pred_fallthru
          _
      $region128: #{tpu_custom_call.1} parent=5 // pred_fallthru
        _
      %p1999 = scmp.le.s32.totalorder 2, %s36
      // Predicated region
      $region133: #{tpu_custom_call.1} parent=5 // pred_check
        %p2000 = pneg %p1999
      $region134: #{tpu_custom_call.1} parent=5 // pred_check_branch
        %2002 = sbr.rel (%p2000) target = $region136
      $region135: #{tpu_custom_call.1} parent=5 // pred_region
        %s2003 = ssub.s32 %s36, 2
        // Predicated region
        $region137: #{tpu_custom_call.1} parent=135 // pred_check
          %p2004 = pneg %p637
        $region138: #{tpu_custom_call.1} parent=135 // pred_check_branch
          %2006 = sbr.rel (%p2004) target = $region140
        $region139: #{tpu_custom_call.1} parent=135 // pred_region
          %s2007 = sand.u32 %s622, 1
          %s2008 = scalar_lea.sflag [#allocation3], %s2007
          %s2009 = sand.u32 %s622, 1
          %s2010 = smul.addr %s2009, 16
          %s2011 = scalar_lea.vmem [#allocation2], %s2010
          %2013 = dma.done %s2008, 256
        $region140: #{tpu_custom_call.1} parent=135 // pred_fallthru
          _
      $region136: #{tpu_custom_call.1} parent=5 // pred_fallthru
        _
    $region6: #{tpu_custom_call.1} parent=1 // loop_footer
      %s40 = sadd.s32 1, %s36
    $region7: #{tpu_custom_call.1} parent=1 // loop_footer_branch
      %35 = sbr.rel target = $region3
    $region8: #{tpu_custom_call.1} parent=1 // loop_exit
      _
    %2014 = vsyncpa [#allocation3], 1
    %s2015 = scalar_lea.sflag [#allocation3], 1
    %2016 = vsyncpa %s2015, 1

</llo_original>
